<compile_context>
chip_gen: v6e
topology: v6e:2x2x1
jax: 0.10.0
libtpu: 0.0.40
codegen_flags: <defaults>
</compile_context>

<pallas_src>
import functools
import math

import jax
import jax.numpy as jnp
from jax.experimental import pallas as pl
from jax.experimental.pallas import tpu as pltpu


def _siren_kernel(num_hidden, compute_dtype, x_ref, *refs):
    """refs = (w_h1, ..., w_hH, w_out, b_out, o_ref).

    All tensors are in "rows-on-lanes" layout:
      x_ref : (in_dim, tile_n)
      w_hi  : (hidden_i, fan_in_i)   -- already scaled by w0, in compute_dtype
      w_out : (out_dim, hidden_last) -- in compute_dtype
      b_out : (out_dim, 1)           -- f32
      o_ref : (out_dim, tile_n)

    Hidden layers: h = sin((w0*W_i) @ h)    (bias=False, as has_bias=False)
    Output layer : o = W_out @ h + b_out    (nn.Linear default bias=True)
    """
    o_ref = refs[-1]
    b_out_ref = refs[-2]
    w_out_ref = refs[-3]
    w_hidden_refs = refs[:num_hidden]

    # MXU operands in compute_dtype (bf16 by default); accumulate in f32;
    # sine evaluated in f32 on the VPU for accuracy.
    h = x_ref[...].astype(compute_dtype)                  # (in_dim, tile_n)
    for w_ref in w_hidden_refs:
        acc = jnp.dot(w_ref[...], h, preferred_element_type=jnp.float32)
        h = jnp.sin(acc).astype(compute_dtype)
    out = jnp.dot(w_out_ref[...], h, preferred_element_type=jnp.float32)
    out = out + b_out_ref[...]                            # (out_dim,1) bcast
    o_ref[...] = out.astype(o_ref.dtype)


def prepare_kernel_params(params, *, w0=1.0, compute_dtype=jnp.bfloat16):
    """One-time host/XLA-side prep: transpose to (out, in), fold w0, and cast
    the matmul operands to the MXU compute dtype (bias stays f32)."""
    hidden_ws = [(w0 * w).T.astype(compute_dtype) for w in params["hidden_ws"]]
    w_out = params["w_out"].T.astype(compute_dtype)          # (out_dim, hidden)
    b_out = params["b_out"].reshape(-1, 1).astype(jnp.float32)  # (out_dim, 1)
    return {"hidden_ws": hidden_ws, "w_out": w_out, "b_out": b_out}


def siren_forward(x, kparams, *, tile_n=16384):
    """x: (..., in_dim).  kparams: output of prepare_kernel_params."""
    hidden_ws = kparams["hidden_ws"]
    w_out = kparams["w_out"]
    b_out = kparams["b_out"]
    compute_dtype = hidden_ws[0].dtype

    lead_shape = x.shape[:-1]
    in_dim = x.shape[-1]
    out_dim = w_out.shape[0]
    max_hidden = max(int(w.shape[0]) for w in hidden_ws)

    n_rows = int(math.prod(lead_shape)) if lead_shape else 1

    # Rows on the lane axis: (in_dim, N).  Wrapper-side layout plumbing.
    xt = x.reshape(-1, in_dim).T

    # --- tile_n selection ---------------------------------------------------
    # Keep it a multiple of 128 (lane constraint), no bigger than the data,
    # and small enough that the grid has >= 2 steps whenever the input spans
    # >= 2 lane blocks (so both v7x TensorCores get work on the parallel axis).
    n_lane_blocks = pl.cdiv(n_rows, 128)
    tile_n = min(int(tile_n), n_lane_blocks * 128)
    tile_n = max(128, (tile_n // 128) * 128)
    if n_lane_blocks >= 2:
        tile_n = min(tile_n, pl.cdiv(n_lane_blocks, 2) * 128)
    grid = (pl.cdiv(n_rows, tile_n),)

    # --- explicit VMEM budget (review item) ----------------------------------
    in_bytes = jnp.dtype(x.dtype).itemsize
    cd_bytes = jnp.dtype(compute_dtype).itemsize
    per_col = (2 * in_dim * in_bytes          # x tile, double-buffered
               + 2 * out_dim * in_bytes       # out tile, double-buffered
               + 3 * max_hidden * 4           # live f32 acc / sin intermediates
               + 2 * max_hidden * cd_bytes)   # compute-dtype h operands
    vmem_bytes = per_col * tile_n + (1 << 20)  # + weights / headroom
    vmem_bytes = int(min(max(vmem_bytes, 16 << 20), 48 << 20))

    # Whole-array (un-tiled) specs for the small weight/bias matrices
    # (grid-invariant index_map -> DMA'd once, no per-step re-fetch).
    def full_spec(arr):
        return pl.BlockSpec(arr.shape, lambda i, _nd=arr.ndim: (0,) * _nd)

    in_specs = [pl.BlockSpec((in_dim, tile_n), lambda i: (0, i))]
    in_specs += [full_spec(w) for w in hidden_ws]
    in_specs += [full_spec(w_out), full_spec(b_out)]

    kernel = functools.partial(_siren_kernel, len(hidden_ws), compute_dtype)

    out_t = pl.pallas_call(
        kernel,
        out_shape=jax.ShapeDtypeStruct((out_dim, n_rows), x.dtype),
        grid_spec=pltpu.PrefetchScalarGridSpec(
            num_scalar_prefetch=0,
            grid=grid,
            in_specs=in_specs,
            out_specs=pl.BlockSpec((out_dim, tile_n), lambda i: (0, i)),
        ),
        compiler_params=pltpu.CompilerParams(
            dimension_semantics=("parallel",),
            vmem_limit_bytes=vmem_bytes),
    )(xt, *hidden_ws, w_out, b_out)

    return out_t.T.reshape(*lead_shape, out_dim)


def init_siren_params(key, in_dim, out_dim, hidden_list):
    """Deterministic init mimicking torch.nn.Linear defaults:
    U(-1/sqrt(fan_in), 1/sqrt(fan_in)) for weights and biases.
    Stored in "natural" math layout: weights (fan_in, fan_out)."""
    hidden_ws = []
    lastv = in_dim
    for hidden in hidden_list:
        key, sub = jax.random.split(key)
        bound = 1.0 / jnp.sqrt(lastv)
        hidden_ws.append(
            jax.random.uniform(sub, (lastv, hidden), jnp.float32,
                               minval=-bound, maxval=bound))
        lastv = hidden
    key, k_w, k_b = jax.random.split(key, 3)
    bound = 1.0 / jnp.sqrt(lastv)
    w_out = jax.random.uniform(k_w, (lastv, out_dim), jnp.float32,
                               minval=-bound, maxval=bound)
    b_out = jax.random.uniform(k_b, (out_dim,), jnp.float32,
                               minval=-bound, maxval=bound)
    return {"hidden_ws": hidden_ws, "w_out": w_out, "b_out": b_out}


def siren_reference(x, params, *, w0=1.0):
    """Plain-JAX f32 reference matching the PyTorch forward."""
    lead = x.shape[:-1]
    h = x.reshape(-1, x.shape[-1]).astype(jnp.float32)
    for w in params["hidden_ws"]:
        h = jnp.sin(w0 * (h @ w))
    out = h @ params["w_out"] + params["b_out"][None, :]
    return out.reshape(*lead, -1).astype(x.dtype)


if __name__ == "__main__":
    # SIREN(in_dim=2, out_dim=3, hidden_list=[32, 32, 32],
    #       has_bn=False, has_bias=False, w0=1.0)
    in_dim, out_dim = 2, 3
    hidden_list = [32, 32, 32]
    w0 = 1.0

    key = jax.random.PRNGKey(0)
    key, k_params, k_x = jax.random.split(key, 3)
    params = init_siren_params(k_params, in_dim, out_dim, hidden_list)

    # Coordinate-grid style input: (batch=2, H=16, W=16, in_dim=2) -> 512 rows,
    # which also exercises a multi-step ("parallel") grid after tile clamping.
    x = jax.random.uniform(k_x, (2, 16, 16, in_dim), jnp.float32,
                           minval=-1.0, maxval=1.0)
    ref = siren_reference(x, params, w0=w0)

    # 1) f32 compute path: tight check of the kernel logic itself.
    kparams_f32 = prepare_kernel_params(params, w0=w0,
                                        compute_dtype=jnp.float32)
    out_f32 = jax.block_until_ready(siren_forward(x, kparams_f32))
    assert out_f32.shape == (2, 16, 16, out_dim), out_f32.shape
    assert jnp.allclose(out_f32, ref, atol=1e-4, rtol=1e-4), (
        float(jnp.max(jnp.abs(out_f32 - ref))))

    # 2) Default bf16-MXU path (f32 accumulation + f32 sine): validated
    #    against the f32 reference with a tolerance matched to bf16 operands.
    kparams_bf16 = prepare_kernel_params(params, w0=w0)
    out_bf16 = jax.block_until_ready(siren_forward(x, kparams_bf16))
    assert out_bf16.shape == (2, 16, 16, out_dim), out_bf16.shape
    assert jnp.allclose(out_bf16, ref, atol=5e-2, rtol=5e-2), (
        float(jnp.max(jnp.abs(out_bf16 - ref))))

    # 3) Degenerate tiny-N case (n_rows < 128): ragged lane block.
    key, k_small = jax.random.split(key)
    x_small = jax.random.uniform(k_small, (5, in_dim), jnp.float32,
                                 minval=-1.0, maxval=1.0)
    out_small = jax.block_until_ready(siren_forward(x_small, kparams_f32))
    ref_small = siren_reference(x_small, params, w0=w0)
    assert out_small.shape == (5, out_dim), out_small.shape
    assert jnp.allclose(out_small, ref_small, atol=1e-4, rtol=1e-4), (
        float(jnp.max(jnp.abs(out_small - ref_small))))

    print("KERNEL_OK")
</pallas_src>

<mosaic_0001>
module attributes {stable_mosaic.version = 11 : i64} {
  func.func @_siren_kernel(%arg0: i32, %arg1: memref<2x256xf32, #tpu.memory_space<vmem>>, %arg2: memref<32x2xf32, #tpu.memory_space<vmem>>, %arg3: memref<32x32xf32, #tpu.memory_space<vmem>>, %arg4: memref<32x32xf32, #tpu.memory_space<vmem>>, %arg5: memref<3x32xf32, #tpu.memory_space<vmem>>, %arg6: memref<3x1xf32, #tpu.memory_space<vmem>>, %arg7: memref<3x256xf32, #tpu.memory_space<vmem>>) attributes {dimension_semantics = [#tpu.dimension_semantics<parallel>], iteration_bounds = array<i64: 2>, scalar_prefetch = 0 : i64, scratch_operands = 0 : i64, tpu.core_type = #tpu.core_type<tc>, window_params = [{transform_indices = @transform_0, window_bounds = array<i64: 2, 256>}, {pipeline_mode = #tpu.pipeline_mode<synchronous>, transform_indices = @transform_1, window_bounds = array<i64: 32, 2>}, {pipeline_mode = #tpu.pipeline_mode<synchronous>, transform_indices = @transform_2, window_bounds = array<i64: 32, 32>}, {pipeline_mode = #tpu.pipeline_mode<synchronous>, transform_indices = @transform_3, window_bounds = array<i64: 32, 32>}, {pipeline_mode = #tpu.pipeline_mode<synchronous>, transform_indices = @transform_4, window_bounds = array<i64: 3, 32>}, {pipeline_mode = #tpu.pipeline_mode<synchronous>, transform_indices = @transform_5, window_bounds = array<i64: 3, 1>}, {transform_indices = @transform_6, window_bounds = array<i64: 3, 256>}]} {
    %c0 = arith.constant 0 : index
    %c0_0 = arith.constant 0 : index
    %0 = vector.load %arg1[%c0, %c0_0] : memref<2x256xf32, #tpu.memory_space<vmem>>, vector<2x256xf32>
    %c0_1 = arith.constant 0 : index
    %c0_2 = arith.constant 0 : index
    %1 = vector.load %arg2[%c0_1, %c0_2] : memref<32x2xf32, #tpu.memory_space<vmem>>, vector<32x2xf32>
    %cst = arith.constant dense<0.000000e+00> : vector<32x256xf32>
    %2 = tpu.matmul %1, %0, %cst {dimension_numbers = #tpu.dot_dimension_numbers<[1], [0], [0], [1], [0, 0, 1, 1], [], []>} : vector<32x2xf32>, vector<2x256xf32>, vector<32x256xf32> -> vector<32x256xf32>
    %3 = math.sin %2 : vector<32x256xf32>
    %c0_3 = arith.constant 0 : index
    %c0_4 = arith.constant 0 : index
    %4 = vector.load %arg3[%c0_3, %c0_4] : memref<32x32xf32, #tpu.memory_space<vmem>>, vector<32x32xf32>
    %cst_5 = arith.constant dense<0.000000e+00> : vector<32x256xf32>
    %5 = tpu.matmul %4, %3, %cst_5 {dimension_numbers = #tpu.dot_dimension_numbers<[1], [0], [0], [1], [0, 0, 1, 1], [], []>} : vector<32x32xf32>, vector<32x256xf32>, vector<32x256xf32> -> vector<32x256xf32>
    %6 = math.sin %5 : vector<32x256xf32>
    %c0_6 = arith.constant 0 : index
    %c0_7 = arith.constant 0 : index
    %7 = vector.load %arg4[%c0_6, %c0_7] : memref<32x32xf32, #tpu.memory_space<vmem>>, vector<32x32xf32>
    %cst_8 = arith.constant dense<0.000000e+00> : vector<32x256xf32>
    %8 = tpu.matmul %7, %6, %cst_8 {dimension_numbers = #tpu.dot_dimension_numbers<[1], [0], [0], [1], [0, 0, 1, 1], [], []>} : vector<32x32xf32>, vector<32x256xf32>, vector<32x256xf32> -> vector<32x256xf32>
    %9 = math.sin %8 : vector<32x256xf32>
    %c0_9 = arith.constant 0 : index
    %c0_10 = arith.constant 0 : index
    %10 = vector.load %arg5[%c0_9, %c0_10] : memref<3x32xf32, #tpu.memory_space<vmem>>, vector<3x32xf32>
    %cst_11 = arith.constant dense<0.000000e+00> : vector<3x256xf32>
    %11 = tpu.matmul %10, %9, %cst_11 {dimension_numbers = #tpu.dot_dimension_numbers<[1], [0], [0], [1], [0, 0, 1, 1], [], []>} : vector<3x32xf32>, vector<32x256xf32>, vector<3x256xf32> -> vector<3x256xf32>
    %c0_12 = arith.constant 0 : index
    %c0_13 = arith.constant 0 : index
    %12 = vector.load %arg6[%c0_12, %c0_13] : memref<3x1xf32, #tpu.memory_space<vmem>>, vector<3x1xf32>
    %13 = vector.broadcast %12 : vector<3x1xf32> to vector<3x256xf32>
    %14 = arith.addf %11, %13 : vector<3x256xf32>
    %c0_14 = arith.constant 0 : index
    %c0_15 = arith.constant 0 : index
    %15 = vector.load %arg7[%c0_14, %c0_15] : memref<3x256xf32, #tpu.memory_space<vmem>>, vector<3x256xf32>
    tpu.vector_store %arg7[%c0_14, %c0_15], %14 {strides = array<i32>} : memref<3x256xf32, #tpu.memory_space<vmem>>, vector<3x256xf32>,
    return
  }
  func.func @transform_0(%arg0: i32) -> (i32, i32) {
    %c0_i32 = arith.constant 0 : i32
    %c0_i32_0 = arith.constant 0 : i32
    return %c0_i32, %arg0 : i32, i32
  }
  func.func @transform_1(%arg0: i32) -> (i32, i32) {
    %c0_i32 = arith.constant 0 : i32
    %c0_i32_0 = arith.constant 0 : i32
    %c0_i32_1 = arith.constant 0 : i32
    return %c0_i32, %c0_i32_0 : i32, i32
  }
  func.func @transform_2(%arg0: i32) -> (i32, i32) {
    %c0_i32 = arith.constant 0 : i32
    %c0_i32_0 = arith.constant 0 : i32
    %c0_i32_1 = arith.constant 0 : i32
    return %c0_i32, %c0_i32_0 : i32, i32
  }
  func.func @transform_3(%arg0: i32) -> (i32, i32) {
    %c0_i32 = arith.constant 0 : i32
    %c0_i32_0 = arith.constant 0 : i32
    %c0_i32_1 = arith.constant 0 : i32
    return %c0_i32, %c0_i32_0 : i32, i32
  }
  func.func @transform_4(%arg0: i32) -> (i32, i32) {
    %c0_i32 = arith.constant 0 : i32
    %c0_i32_0 = arith.constant 0 : i32
    %c0_i32_1 = arith.constant 0 : i32
    return %c0_i32, %c0_i32_0 : i32, i32
  }
  func.func @transform_5(%arg0: i32) -> (i32, i32) {
    %c0_i32 = arith.constant 0 : i32
    %c0_i32_0 = arith.constant 0 : i32
    %c0_i32_1 = arith.constant 0 : i32
    return %c0_i32, %c0_i32_0 : i32, i32
  }
  func.func @transform_6(%arg0: i32) -> (i32, i32) {
    %c0_i32 = arith.constant 0 : i32
    %c0_i32_0 = arith.constant 0 : i32
    return %c0_i32, %arg0 : i32, i32
  }
}

</mosaic_0001>

<llo_original>
// kernel: tpu_custom_call.1
$region0: #{tpu_custom_call.1}
  #allocation0 [shape = 'u32[]', space=smem, size = 0x4, offset = 0x4, fixed_abs, tag = 'smem constant byte address 0x4 - core index']
  #allocation1 [shape = 'u32[144,128]{1,0:T(1,128)}', space=vmem, size = 0x12000, scoped, tag = 'internal scratch']
  %s0 = inlined_call_operand.vmem [shape: f32[2,512], index: 0, kind: input, shape index: {}]
  %s1 = inlined_call_operand.vmem [shape: f32[32,2], index: 1, kind: input, shape index: {}]
  %s2 = inlined_call_operand.vmem [shape: f32[32,32], index: 2, kind: input, shape index: {}]
  %s3 = inlined_call_operand.hbm [shape: f32[32,32], index: 3, kind: input, shape index: {}]
  %s4 = inlined_call_operand.vmem [shape: f32[3,32], index: 4, kind: input, shape index: {}]
  %s5 = inlined_call_operand.vmem [shape: f32[3,1], index: 5, kind: input, shape index: {}]
  %s6 = inlined_call_operand.hbm [shape: f32[3,512], index: 6, kind: output, shape index: {}]
  %s7 = sld [smem:[#allocation0]]
  $region61: #{tpu_custom_call.1} parent=0
    _
  %s9 = ssub.s32 1, %s7
  %s10 = scalar_select 0, %s9, %s7
  $region1: #{tpu_custom_call.1} parent=0
    #allocation2 [shape = 'u8[16384]{0}', space=vmem, size = 0x4000, scoped, tag = 'input window, operand 3, single buffered']
    #allocation3 [shape = 's32[2]{0}', space=sflag, size = 0x8, scoped, tag = 'scoped memory for tpu_custom_call.1']
    #allocation4 [shape = 's32[2]{0}', space=sflag, size = 0x8, scoped, tag = 'scoped memory for tpu_custom_call.1']
    #allocation5 [shape = 'u8[8192]{0}', space=vmem, size = 0x2000, scoped, tag = 'output window, operand 0']
    %11 = vsyncpa [#allocation3], 0
    %12 = vsyncpa [#allocation4], 0
    %s13 = scalar_lea.sflag [#allocation4], 1
    %14 = vsyncpa %s13, 0
    loop: start=0, step=1, limit=4
    $region2: #{tpu_custom_call.1} parent=1 // loop_pre_header
      _
    $region3: #{tpu_custom_call.1} parent=1 // loop_header
      %s16 = sphi 0, %s20
      %p17 = scmp.ge.s32.totalorder %s16, 4
      %s26 = sphi 0, %s28
      %s29 = sphi 0, %s26
      %s30 = sphi 0, %s29
      %s46 = sphi 0, %s30
      %s50 = sphi 0, %s50
      %s52 = sphi 0, %s50
      %s53 = sphi 0, %s52
      %s67 = sphi 0, %s53
      %s71 = sphi 0, %s71
      %s73 = sphi 0, %s71
      %s74 = sphi 0, %s73
      %s88 = sphi 0, %s74
      %s92 = sphi 0, %s92
      %s94 = sphi 0, %s92
      %s95 = sphi 0, %s94
      %s109 = sphi 0, %s95
      %s113 = sphi 0, %s113
      %s115 = sphi 0, %s113
      %s116 = sphi 0, %s115
      %s130 = sphi 0, %s116
      %s134 = sphi 0, %s134
      %s136 = sphi 0, %s134
      %s137 = sphi 0, %s136
      %s151 = sphi 0, %s137
      %s157 = sphi 0, %s159
      %s160 = sphi 0, %s157
      %s161 = sphi 0, %s160
      %s177 = sphi 0, %s161
    $region4: #{tpu_custom_call.1} parent=1 // loop_header_branch
      %19 = sbr.rel (%p17) target = $region8
    $region5: #{tpu_custom_call.1} parent=1 // loop_body
      %s21 = ssub.s32 %s16, 1
      %s22 = ssub.s32 %s16, 2
      %s23 = sadd.s32 %s16, 1
      %s24 = ssub.s32 %s16, %s23
      %p25 = scmp.eq.s32.totalorder %s24, 0
      %s27 = sadd.s32 %s26, 1
      %s28 = scalar_select %p25, %s26, %s27
      %p31 = pneg %p25
      %p32 = scmp.eq.s32.totalorder %s16, 1
      %p33 = por %p31, %p32
      %p34 = scmp.ne.s32.totalorder %s26, %s29
      %p35 = scmp.eq.s32.totalorder %s16, 0
      %p36 = por %p34, %p35
      %p37 = scmp.ne.s32.totalorder %s26, %s29
      %p38 = scmp.eq.s32.totalorder %s21, 1
      %p39 = por %p37, %p38
      %p40 = scmp.ne.s32.totalorder %s29, %s30
      %p41 = scmp.eq.s32.totalorder %s21, 0
      %p42 = por %p40, %p41
      %p43 = scmp.ne.s32.totalorder %s29, %s30
      %p44 = scmp.eq.s32.totalorder %s22, 1
      %p45 = por %p43, %p44
      %p47 = scmp.ne.s32.totalorder %s30, %s46
      %p48 = scmp.eq.s32.totalorder %s22, 0
      %p49 = por %p47, %p48
      %s51 = sadd.s32 %s50, 1
      %p54 = scmp.eq.s32.totalorder %s16, 1
      %p55 = scmp.ne.s32.totalorder %s50, %s52
      %p56 = scmp.eq.s32.totalorder %s16, 0
      %p57 = por %p55, %p56
      %p58 = scmp.ne.s32.totalorder %s50, %s52
      %p59 = scmp.eq.s32.totalorder %s21, 1
      %p60 = por %p58, %p59
      %p61 = scmp.ne.s32.totalorder %s52, %s53
      %p62 = scmp.eq.s32.totalorder %s21, 0
      %p63 = por %p61, %p62
      %p64 = scmp.ne.s32.totalorder %s52, %s53
      %p65 = scmp.eq.s32.totalorder %s22, 1
      %p66 = por %p64, %p65
      %p68 = scmp.ne.s32.totalorder %s53, %s67
      %p69 = scmp.eq.s32.totalorder %s22, 0
      %p70 = por %p68, %p69
      %s72 = sadd.s32 %s71, 1
      %p75 = scmp.eq.s32.totalorder %s16, 1
      %p76 = scmp.ne.s32.totalorder %s71, %s73
      %p77 = scmp.eq.s32.totalorder %s16, 0
      %p78 = por %p76, %p77
      %p79 = scmp.ne.s32.totalorder %s71, %s73
      %p80 = scmp.eq.s32.totalorder %s21, 1
      %p81 = por %p79, %p80
      %p82 = scmp.ne.s32.totalorder %s73, %s74
      %p83 = scmp.eq.s32.totalorder %s21, 0
      %p84 = por %p82, %p83
      %p85 = scmp.ne.s32.totalorder %s73, %s74
      %p86 = scmp.eq.s32.totalorder %s22, 1
      %p87 = por %p85, %p86
      %p89 = scmp.ne.s32.totalorder %s74, %s88
      %p90 = scmp.eq.s32.totalorder %s22, 0
      %p91 = por %p89, %p90
      %s93 = sadd.s32 %s92, 1
      %p96 = scmp.eq.s32.totalorder %s16, 1
      %p97 = scmp.ne.s32.totalorder %s92, %s94
      %p98 = scmp.eq.s32.totalorder %s16, 0
      %p99 = por %p97, %p98
      %p100 = scmp.ne.s32.totalorder %s92, %s94
      %p101 = scmp.eq.s32.totalorder %s21, 1
      %p102 = por %p100, %p101
      %p103 = scmp.ne.s32.totalorder %s94, %s95
      %p104 = scmp.eq.s32.totalorder %s21, 0
      %p105 = por %p103, %p104
      %p106 = scmp.ne.s32.totalorder %s94, %s95
      %p107 = scmp.eq.s32.totalorder %s22, 1
      %p108 = por %p106, %p107
      %p110 = scmp.ne.s32.totalorder %s95, %s109
      %p111 = scmp.eq.s32.totalorder %s22, 0
      %p112 = por %p110, %p111
      %s114 = sadd.s32 %s113, 1
      %p117 = scmp.eq.s32.totalorder %s16, 1
      %p118 = scmp.ne.s32.totalorder %s113, %s115
      %p119 = scmp.eq.s32.totalorder %s16, 0
      %p120 = por %p118, %p119
      %p121 = scmp.ne.s32.totalorder %s113, %s115
      %p122 = scmp.eq.s32.totalorder %s21, 1
      %p123 = por %p121, %p122
      %p124 = scmp.ne.s32.totalorder %s115, %s116
      %p125 = scmp.eq.s32.totalorder %s21, 0
      %p126 = por %p124, %p125
      %p127 = scmp.ne.s32.totalorder %s115, %s116
      %p128 = scmp.eq.s32.totalorder %s22, 1
      %p129 = por %p127, %p128
      %p131 = scmp.ne.s32.totalorder %s116, %s130
      %p132 = scmp.eq.s32.totalorder %s22, 0
      %p133 = por %p131, %p132
      %s135 = sadd.s32 %s134, 1
      %p138 = scmp.eq.s32.totalorder %s16, 1
      %p139 = scmp.ne.s32.totalorder %s134, %s136
      %p140 = scmp.eq.s32.totalorder %s16, 0
      %p141 = por %p139, %p140
      %p142 = scmp.ne.s32.totalorder %s134, %s136
      %p143 = scmp.eq.s32.totalorder %s21, 1
      %p144 = por %p142, %p143
      %p145 = scmp.ne.s32.totalorder %s136, %s137
      %p146 = scmp.eq.s32.totalorder %s21, 0
      %p147 = por %p145, %p146
      %p148 = scmp.ne.s32.totalorder %s136, %s137
      %p149 = scmp.eq.s32.totalorder %s22, 1
      %p150 = por %p148, %p149
      %p152 = scmp.ne.s32.totalorder %s137, %s151
      %p153 = scmp.eq.s32.totalorder %s22, 0
      %p154 = por %p152, %p153
      %s155 = ssub.s32 %s16, %s23
      %p156 = scmp.eq.s32.totalorder %s155, 0
      %s158 = sadd.s32 %s157, 1
      %s159 = scalar_select %p156, %s157, %s158
      %p162 = pneg %p156
      %p163 = scmp.eq.s32.totalorder %s16, 1
      %p164 = por %p162, %p163
      %p165 = scmp.ne.s32.totalorder %s157, %s160
      %p166 = scmp.eq.s32.totalorder %s16, 0
      %p167 = por %p165, %p166
      %p168 = scmp.ne.s32.totalorder %s157, %s160
      %p169 = scmp.eq.s32.totalorder %s21, 1
      %p170 = por %p168, %p169
      %p171 = scmp.ne.s32.totalorder %s160, %s161
      %p172 = scmp.eq.s32.totalorder %s21, 0
      %p173 = por %p171, %p172
      %p174 = scmp.ne.s32.totalorder %s160, %s161
      %p175 = scmp.eq.s32.totalorder %s22, 1
      %p176 = por %p174, %p175
      %p178 = scmp.ne.s32.totalorder %s161, %s177
      %p179 = scmp.eq.s32.totalorder %s22, 0
      %p180 = por %p178, %p179
      %p181 = scmp.le.s32.totalorder 1, %s16
      %p182 = scmp.lt.s32.totalorder %s16, 3
      %p183 = pnand %p181, %p182
      %p184 = pneg %p183
      // Predicated region
      $region9: #{tpu_custom_call.1} parent=5 // pred_check
        _
      $region10: #{tpu_custom_call.1} parent=5 // pred_check_branch
        %186 = sbr.rel (%p183) target = $region12
      $region11: #{tpu_custom_call.1} parent=5 // pred_region
        %s187 = ssub.s32 %s16, 1
        // Predicated region
        $region13: #{tpu_custom_call.1} parent=11 // pred_check
          %p188 = pneg %p63
        $region14: #{tpu_custom_call.1} parent=11 // pred_check_branch
          %190 = sbr.rel (%p188) target = $region16
        $region15: #{tpu_custom_call.1} parent=11 // pred_region
          _
        $region16: #{tpu_custom_call.1} parent=11 // pred_fallthru
          _
        // Predicated region
        $region17: #{tpu_custom_call.1} parent=11 // pred_check
          %p191 = pneg %p84
        $region18: #{tpu_custom_call.1} parent=11 // pred_check_branch
          %193 = sbr.rel (%p191) target = $region20
        $region19: #{tpu_custom_call.1} parent=11 // pred_region
          _
        $region20: #{tpu_custom_call.1} parent=11 // pred_fallthru
          _
        // Predicated region
        $region21: #{tpu_custom_call.1} parent=11 // pred_check
          %p194 = pneg %p105
        $region22: #{tpu_custom_call.1} parent=11 // pred_check_branch
          %196 = sbr.rel (%p194) target = $region24
        $region23: #{tpu_custom_call.1} parent=11 // pred_region
          %s198 = ssub.s32 512, 512
          %199 = vsyncadd [#allocation3], %s198
          %s200 = sshll.u32 [#allocation2], 4
          %s201 = int_to_ptr.vmem [resolvable:$true] %s200
          %206 = dma.hbm_to_vmem [thread:$0]  %s3, 512, %s201, [#allocation3], 128, 128, 8
        $region24: #{tpu_custom_call.1} parent=11 // pred_fallthru
          _
        // Predicated region
        $region25: #{tpu_custom_call.1} parent=11 // pred_check
          %p207 = pneg %p126
        $region26: #{tpu_custom_call.1} parent=11 // pred_check_branch
          %209 = sbr.rel (%p207) target = $region28
        $region27: #{tpu_custom_call.1} parent=11 // pred_region
          _
        $region28: #{tpu_custom_call.1} parent=11 // pred_fallthru
          _
        // Predicated region
        $region29: #{tpu_custom_call.1} parent=11 // pred_check
          %p210 = pneg %p147
        $region30: #{tpu_custom_call.1} parent=11 // pred_check_branch
          %212 = sbr.rel (%p210) target = $region32
        $region31: #{tpu_custom_call.1} parent=11 // pred_region
          _
        $region32: #{tpu_custom_call.1} parent=11 // pred_fallthru
          _
      $region12: #{tpu_custom_call.1} parent=5 // pred_fallthru
        _
      %p213 = scmp.lt.s32.totalorder %s16, 2
      // Predicated region
      $region33: #{tpu_custom_call.1} parent=5 // pred_check
        %p214 = pneg %p213
      $region34: #{tpu_custom_call.1} parent=5 // pred_check_branch
        %216 = sbr.rel (%p214) target = $region36
      $region35: #{tpu_custom_call.1} parent=5 // pred_region
        // Predicated region
        $region37: #{tpu_custom_call.1} parent=35 // pred_check
          %p217 = pneg %p36
        $region38: #{tpu_custom_call.1} parent=35 // pred_check_branch
          %219 = sbr.rel (%p217) target = $region40
        $region39: #{tpu_custom_call.1} parent=35 // pred_region
          %s220 = smul.u32 2, %s16
          %p221 = scmp.lt.s32.totalorder %s220, 3
          %s222 = scalar_select %p221, %s220, 3
          %s223 = smul.addr %s222, 2
          %s224 = scalar_lea.vmem %s0, %s223
          %s225 = smul.u32 2, %s16
        $region40: #{tpu_custom_call.1} parent=35 // pred_fallthru
          _
      $region36: #{tpu_custom_call.1} parent=5 // pred_fallthru
        _
      %p226 = scmp.le.s32.totalorder 1, %s16
      %p227 = scmp.lt.s32.totalorder %s16, 3
      %p228 = pnand %p226, %p227
      %p229 = pneg %p228
      // Predicated region
      $region41: #{tpu_custom_call.1} parent=5 // pred_check
        _
      $region42: #{tpu_custom_call.1} parent=5 // pred_check_branch
        %231 = sbr.rel (%p228) target = $region44
      $region43: #{tpu_custom_call.1} parent=5 // pred_region
        %s232 = ssub.s32 %s16, 1
        // Predicated region
        $region45: #{tpu_custom_call.1} parent=43 // pred_check
          %p233 = pneg %p105
        $region46: #{tpu_custom_call.1} parent=43 // pred_check_branch
          %235 = sbr.rel (%p233) target = $region48
        $region47: #{tpu_custom_call.1} parent=43 // pred_region
          %236 = dma.done [#allocation3], 512
        $region48: #{tpu_custom_call.1} parent=43 // pred_fallthru
          _
        %s237 = smul.u32 2, %s21
        %p238 = scmp.lt.s32.totalorder %s237, 3
        %s239 = scalar_select %p238, %s237, 3
        %s240 = smul.addr %s239, 2
        %s241 = scalar_lea.vmem %s0, %s240
        %p242 = pneg %p42
        %p243 = pneg %p39
        %p244 = pneg %p63
        %p245 = pneg %p60
        %p246 = pneg %p84
        %p247 = pneg %p81
        %p248 = pneg %p105
        %p249 = pneg %p102
        %p250 = pneg %p126
        %p251 = pneg %p123
        %p252 = pneg %p147
        %p253 = pneg %p144
        %p254 = pneg %p173
        %p255 = pneg %p170
        %s256 = sand.u32 %s160, 1
        %s257 = scalar_lea.sflag [#allocation4], %s256
        %s258 = sand.u32 %s160, 1
        %s259 = smul.addr %s258, 8
        %s260 = scalar_lea.vmem [#allocation5], %s259
        %s261 = smul.u32 2, %s21
        %p262 = scmp.lt.s32.totalorder %s261, 3
        %s263 = scalar_select %p262, %s261, 3
        %s264 = smul.addr %s263, 2
        %s265 = scalar_lea.vmem %s0, %s264
        %s266 = smul.u32 2, %s21
        %s267 = smul.u32 2, %s21
        %v268 = vld [vmem:[%s265] sm:$0xf]
        %v269 = vld [vmem:[%s1] sm:$0xff]
        %v270 = vld [vmem:[%s1 + $0x8] sm:$0xff]
        %v271 = vld [vmem:[%s1 + $0x10] sm:$0xff]
        %v272 = vld [vmem:[%s1 + $0x18] sm:$0xff]
        %v275 = vunpack.c.l.s4 1983009808
        %v276 = vunpack.c.0.s8 %v275
        %v277 = vlaneseq
        %v278 = vshrl.u32 %v277, 7
        %v279 = vsub.s32 %v276, %v278
        %v280 = vrot.slane %v268, %v279
        %v281 = vcombine.high %v280, %v280
        %vm282 = vcmask 15360
        %v284 = vsel %vm282, %v269, 0
        %v287 = vsel %vm282, %v270, 0
        %v290 = vsel %vm282, %v271, 0
        %v293 = vsel %vm282, %v272, 0
        %vm295 = vcmask 1041408
        %v296 = vsel %vm295, %v280, 0
        %v298 = vsel %vm295, %v281, 0
        %300 = vmatprep.subr.mxu0 0.0
        %301 = vmatpush1.msra.mxu0 0.0
        %302 = vmatprep.subr.mxu0 0.0
        %303 = vmatpush1.msra.mxu0 0.0
        %304 = vmatprep.subr.mxu0 0.0
        %305 = vmatpush1.msra.mxu0 0.0
        %306 = vmatprep.subr.mxu0 0.0
        %307 = vmatpush1.msra.mxu0 0.0
        %308 = vmatprep.subr.mxu0 0.0
        %309 = vmatpush1.msra.mxu0 0.0
        %310 = vmatprep.subr.mxu0 0.0
        %311 = vmatpush1.msra.mxu0 0.0
        %312 = vmatprep.subr.mxu0 0.0
        %313 = vmatpush1.msra.mxu0 0.0
        %314 = vmatprep.subr.mxu0 0.0
        %315 = vmatpush1.msra.mxu0 0.0
        %316 = vmatprep.subr.mxu0 0.0
        %317 = vmatpush1.msra.mxu0 0.0
        %318 = vmatprep.subr.mxu0 0.0
        %319 = vmatpush1.msra.mxu0 0.0
        %320 = vmatprep.subr.mxu0 0.0
        %321 = vmatpush1.msra.mxu0 0.0
        %322 = vmatprep.subr.mxu0 0.0
        %323 = vmatpush1.msra.mxu0 0.0
        %324 = vmatprep.subr.mxu0 0.0
        %325 = vmatpush1.msra.mxu0 0.0
        %326 = vmatprep.subr.mxu0 0.0
        %327 = vmatpush1.msra.mxu0 0.0
        %328 = vmatprep.subr.mxu0 0.0
        %329 = vmatpush1.msra.mxu0 0.0
        %330 = vmatprep.subr.mxu0 %v298
        %331 = vmatpush1.msra.mxu0 %v296
        %332 = vmatprep.subr.mxu0 0.0
        %333 = vmatpush2.msra.mxu0 0.0
        %334 = vmatprep.subr.mxu0 0.0
        %335 = vmatpush2.msra.mxu0 0.0
        %336 = vmatprep.subr.mxu0 0.0
        %337 = vmatpush2.msra.mxu0 0.0
        %338 = vmatprep.subr.mxu0 0.0
        %339 = vmatpush2.msra.mxu0 0.0
        %340 = vmatprep.subr.mxu0 0.0
        %341 = vmatpush2.msra.mxu0 0.0
        %342 = vmatprep.subr.mxu0 0.0
        %343 = vmatpush2.msra.mxu0 0.0
        %344 = vmatprep.subr.mxu0 0.0
        %345 = vmatpush2.msra.mxu0 0.0
        %346 = vmatprep.subr.mxu0 0.0
        %347 = vmatpush2.msra.mxu0 0.0
        %348 = vmatprep.subr.mxu0 0.0
        %349 = vmatpush2.msra.mxu0 0.0
        %350 = vmatprep.subr.mxu0 0.0
        %351 = vmatpush2.msra.mxu0 0.0
        %352 = vmatprep.subr.mxu0 0.0
        %353 = vmatpush2.msra.mxu0 0.0
        %354 = vmatprep.subr.mxu0 0.0
        %355 = vmatpush2.msra.mxu0 0.0
        %356 = vmatprep.subr.mxu0 0.0
        %357 = vmatpush2.msra.mxu0 0.0
        %358 = vmatprep.subr.mxu0 0.0
        %359 = vmatpush2.msra.mxu0 0.0
        %360 = vmatprep.subr.mxu0 0.0
        %361 = vmatpush2.msra.mxu0 0.0
        %362 = vmatprep.subr.mxu0 0.0
        %363 = vmatpush2.msra.mxu0 0.0
        %364 = vmatprep.mubr.f32.mxu0 0.0
        %365 = vmatmul.mubr.f32.gmra.mxu0 %v284
        %v366 = vpop.f32.mrf.mxu0
        %v367 = vadd.f32 0.0, %v366
        %v368 = vpop.f32.mrf.mxu0
        %v369 = vadd.f32 0.0, %v368
        %370 = vmatprep.mubr.f32.mxu0 0.0
        %371 = vmatmul.mubr.f32.gmra.mxu0 %v287
        %v372 = vpop.f32.mrf.mxu0
        %v373 = vadd.f32 0.0, %v372
        %v374 = vpop.f32.mrf.mxu0
        %v375 = vadd.f32 0.0, %v374
        %376 = vmatprep.mubr.f32.mxu0 0.0
        %377 = vmatmul.mubr.f32.gmra.mxu0 %v290
        %v378 = vpop.f32.mrf.mxu0
        %v379 = vadd.f32 0.0, %v378
        %v380 = vpop.f32.mrf.mxu0
        %v381 = vadd.f32 0.0, %v380
        %382 = vmatprep.mubr.f32.mxu0 0.0
        %383 = vmatmul.mubr.f32.gmra.mxu0 %v293
        %v384 = vpop.f32.mrf.mxu0
        %v385 = vadd.f32 0.0, %v384
        %v386 = vpop.f32.mrf.mxu0
        %v387 = vadd.f32 0.0, %v386
        %388 = vdwg.mxu0
        %v389 = vand.u32 2147483647, %v367
        %vm390 = vcmp.le.f32.partialorder %v389, 0.7853982
        %vm391 = vcmp.lt.s32.totalorder %v367, 0
        %v392 = vand.u32 %v367, 2139095040
        %v393 = vshrl.u32 %v392, 23
        %v394 = vsub.s32 %v393, 127
        %v395 = vand.u32 2147483647, %v367
        %v396 = vand.u32 %v395, 8388607
        %v397 = vor.u32 %v396, 8388608
        %v398 = vsub.s32 0, %v397
        %v399 = vadd.s32 %v394, 1
        %vm400 = vcmp.gt.s32.totalorder %v399, 0
        %v401 = vsel %vm400, %v399, 0
        %v402 = vshrl.u32 %v401, 5
        %v403 = vand.u32 %v401, 31
        %v404 = vsub.s32 32, %v403
        %v405 = vshrl.u32 683565275, %v404
        %v406 = vshll.u32 683565275, %v403
        %v407 = vshrl.u32 2475754826, %v404
        %v408 = vor.u32 %v406, %v407
        %v409 = vshll.u32 2475754826, %v403
        %v410 = vshrl.u32 2131351028, %v404
        %v411 = vor.u32 %v409, %v410
        %v412 = vshll.u32 2131351028, %v403
        %v413 = vshrl.u32 2102212464, %v404
        %v414 = vor.u32 %v412, %v413
        %v415 = vshll.u32 2102212464, %v403
        %v416 = vshrl.u32 920167782, %v404
        %v417 = vor.u32 %v415, %v416
        %v418 = vshll.u32 920167782, %v403
        %v419 = vshrl.u32 1326507024, %v404
        %v420 = vor.u32 %v418, %v419
        %vm421 = vcmp.lt.s32.totalorder %v402, 1
        %vm422 = vcmp.lt.s32.totalorder %v402, 2
        %vm423 = vcmp.lt.s32.totalorder %v402, 3
        %vm424 = vcmp.lt.s32.totalorder %v402, 4
        %v425 = vsel %vm421, %v405, %v408
        %v426 = vsel %vm424, %v414, 2102212464
        %v427 = vsel %vm423, %v411, %v426
        %v428 = vsel %vm422, %v425, %v427
        %v429 = vsel %vm421, %v408, %v411
        %v430 = vsel %vm424, %v417, 920167782
        %v431 = vsel %vm423, %v414, %v430
        %v432 = vsel %vm422, %v429, %v431
        %v433 = vsel %vm421, %v411, %v414
        %v434 = vsel %vm424, %v420, 1326507024
        %v435 = vsel %vm423, %v417, %v434
        %v436 = vsel %vm422, %v433, %v435
        %v437 = vshll.u32 %v397, 8
        %v438 = vmul.u32.u64.compose %v437, %v436
        %v439 = vextract.low.u32 %v438
        %v440 = vextract.high.u32 %v438
        %v441 = vmul.u32.u64.compose %v437, %v432
        %v442 = vextract.low.u32 %v441
        %v443 = vextract.high.u32 %v441
        %v444 = vmul.u32 %v437, %v428
        %v445 = vadd.s32 %v440, %v442
        %vm446 = vc.u32 %v440, %v442
        %v447 = vadd.s32 %v443, 1
        %v448 = vsel %vm446, %v447, %v443
        %v449 = vadd.s32 %v444, %v448
        %v450 = vadd.s32 %v449, 536870912
        %v451 = vshrl.u32 %v450, 30
        %v452 = vshll.u32 %v451, 30
        %v453 = vsub.s32 %v449, %v452
        %vm454 = vcmp.lt.s32.totalorder %v453, 0
        %v455 = vsub.s32 0, %v453
        %v456 = vsel %vm454, %v455, %v453
        %v457 = vclz %v456
        %v458 = vsub.s32 %v457, 2
        %vm459 = vcmp.gt.s32.totalorder 0, %v458
        %v460 = vsel %vm459, 0, %v458
        %v461 = vsub.s32 32, %v460
        %v462 = vshll.u32 %v453, %v460
        %v463 = vshrl.u32 %v445, %v461
        %v464 = vor.u32 %v462, %v463
        %v465 = vsub.s32 4294967266, %v460
        %v466 = vadd.s32 %v465, 127
        %v467 = vshll.u32 %v466, 23
        %v468 = vor.u32 4788187, %v467
        %v469 = vand.u32 2147483647, %v468
        %v471 = vcvt.s32.f32 %v464
        %v472 = vmul.f32 %v471, %v469
        %v473 = vxor.u32 %v472, 2147483648
        %v474 = vsel %vm391, %v473, %v472
        %v475 = vsub.s32 4, %v451
        %v476 = vsel %vm391, %v475, %v451
        %v477 = vsel %vm390, %v367, %v474
        %v478 = vsel %vm390, 0, %v476
        %v479 = vcosq.f32.pop %v477
        %v480 = vsinq.f32.pop %v477
        %vm481 = vweird.f32 %v367
        %v482 = vadd.s32 %v478, 3
        %v483 = vand.u32 %v482, 3
        %vm484 = vcmp.lt.s32.totalorder %v483, 2
        %vm485 = vcmp.eq.s32.totalorder %v483, 0
        %v486 = vxor.u32 %v480, 2147483648
        %v487 = vsel %vm485, %v479, %v486
        %vm488 = vcmp.eq.s32.totalorder %v483, 2
        %v489 = vxor.u32 %v479, 2147483648
        %v490 = vsel %vm488, %v489, %v480
        %v491 = vsel %vm484, %v487, %v490
        %v492 = vsel %vm481, nan, %v491
        %v493 = vand.u32 2147483647, %v369
        %vm494 = vcmp.le.f32.partialorder %v493, 0.7853982
        %vm495 = vcmp.lt.s32.totalorder %v369, 0
        %v496 = vand.u32 %v369, 2139095040
        %v497 = vshrl.u32 %v496, 23
        %v498 = vsub.s32 %v497, 127
        %v499 = vand.u32 2147483647, %v369
        %v500 = vand.u32 %v499, 8388607
        %v501 = vor.u32 %v500, 8388608
        %v502 = vsub.s32 0, %v501
        %v503 = vadd.s32 %v498, 1
        %vm504 = vcmp.gt.s32.totalorder %v503, 0
        %v505 = vsel %vm504, %v503, 0
        %v506 = vshrl.u32 %v505, 5
        %v507 = vand.u32 %v505, 31
        %v508 = vsub.s32 32, %v507
        %v509 = vshrl.u32 683565275, %v508
        %v510 = vshll.u32 683565275, %v507
        %v511 = vshrl.u32 2475754826, %v508
        %v512 = vor.u32 %v510, %v511
        %v513 = vshll.u32 2475754826, %v507
        %v514 = vshrl.u32 2131351028, %v508
        %v515 = vor.u32 %v513, %v514
        %v516 = vshll.u32 2131351028, %v507
        %v517 = vshrl.u32 2102212464, %v508
        %v518 = vor.u32 %v516, %v517
        %v519 = vshll.u32 2102212464, %v507
        %v520 = vshrl.u32 920167782, %v508
        %v521 = vor.u32 %v519, %v520
        %v522 = vshll.u32 920167782, %v507
        %v523 = vshrl.u32 1326507024, %v508
        %v524 = vor.u32 %v522, %v523
        %vm525 = vcmp.lt.s32.totalorder %v506, 1
        %vm526 = vcmp.lt.s32.totalorder %v506, 2
        %vm527 = vcmp.lt.s32.totalorder %v506, 3
        %vm528 = vcmp.lt.s32.totalorder %v506, 4
        %v529 = vsel %vm525, %v509, %v512
        %v530 = vsel %vm528, %v518, 2102212464
        %v531 = vsel %vm527, %v515, %v530
        %v532 = vsel %vm526, %v529, %v531
        %v533 = vsel %vm525, %v512, %v515
        %v534 = vsel %vm528, %v521, 920167782
        %v535 = vsel %vm527, %v518, %v534
        %v536 = vsel %vm526, %v533, %v535
        %v537 = vsel %vm525, %v515, %v518
        %v538 = vsel %vm528, %v524, 1326507024
        %v539 = vsel %vm527, %v521, %v538
        %v540 = vsel %vm526, %v537, %v539
        %v541 = vshll.u32 %v501, 8
        %v542 = vmul.u32.u64.compose %v541, %v540
        %v543 = vextract.low.u32 %v542
        %v544 = vextract.high.u32 %v542
        %v545 = vmul.u32.u64.compose %v541, %v536
        %v546 = vextract.low.u32 %v545
        %v547 = vextract.high.u32 %v545
        %v548 = vmul.u32 %v541, %v532
        %v549 = vadd.s32 %v544, %v546
        %vm550 = vc.u32 %v544, %v546
        %v551 = vadd.s32 %v547, 1
        %v552 = vsel %vm550, %v551, %v547
        %v553 = vadd.s32 %v548, %v552
        %v554 = vadd.s32 %v553, 536870912
        %v555 = vshrl.u32 %v554, 30
        %v556 = vshll.u32 %v555, 30
        %v557 = vsub.s32 %v553, %v556
        %vm558 = vcmp.lt.s32.totalorder %v557, 0
        %v559 = vsub.s32 0, %v557
        %v560 = vsel %vm558, %v559, %v557
        %v561 = vclz %v560
        %v562 = vsub.s32 %v561, 2
        %vm563 = vcmp.gt.s32.totalorder 0, %v562
        %v564 = vsel %vm563, 0, %v562
        %v565 = vsub.s32 32, %v564
        %v566 = vshll.u32 %v557, %v564
        %v567 = vshrl.u32 %v549, %v565
        %v568 = vor.u32 %v566, %v567
        %v569 = vsub.s32 4294967266, %v564
        %v570 = vadd.s32 %v569, 127
        %v571 = vshll.u32 %v570, 23
        %v572 = vor.u32 4788187, %v571
        %v573 = vand.u32 2147483647, %v572
        %v575 = vcvt.s32.f32 %v568
        %v576 = vmul.f32 %v575, %v573
        %v577 = vxor.u32 %v576, 2147483648
        %v578 = vsel %vm495, %v577, %v576
        %v579 = vsub.s32 4, %v555
        %v580 = vsel %vm495, %v579, %v555
        %v581 = vsel %vm494, %v369, %v578
        %v582 = vsel %vm494, 0, %v580
        %v583 = vcosq.f32.pop %v581
        %v584 = vsinq.f32.pop %v581
        %vm585 = vweird.f32 %v369
        %v586 = vadd.s32 %v582, 3
        %v587 = vand.u32 %v586, 3
        %vm588 = vcmp.lt.s32.totalorder %v587, 2
        %vm589 = vcmp.eq.s32.totalorder %v587, 0
        %v590 = vxor.u32 %v584, 2147483648
        %v591 = vsel %vm589, %v583, %v590
        %vm592 = vcmp.eq.s32.totalorder %v587, 2
        %v593 = vxor.u32 %v583, 2147483648
        %v594 = vsel %vm592, %v593, %v584
        %v595 = vsel %vm588, %v591, %v594
        %v596 = vsel %vm585, nan, %v595
        %v597 = vand.u32 2147483647, %v373
        %vm598 = vcmp.le.f32.partialorder %v597, 0.7853982
        %vm599 = vcmp.lt.s32.totalorder %v373, 0
        %v600 = vand.u32 %v373, 2139095040
        %v601 = vshrl.u32 %v600, 23
        %v602 = vsub.s32 %v601, 127
        %v603 = vand.u32 2147483647, %v373
        %v604 = vand.u32 %v603, 8388607
        %v605 = vor.u32 %v604, 8388608
        %v606 = vsub.s32 0, %v605
        %v607 = vadd.s32 %v602, 1
        %vm608 = vcmp.gt.s32.totalorder %v607, 0
        %v609 = vsel %vm608, %v607, 0
        %v610 = vshrl.u32 %v609, 5
        %v611 = vand.u32 %v609, 31
        %v612 = vsub.s32 32, %v611
        %v613 = vshrl.u32 683565275, %v612
        %v614 = vshll.u32 683565275, %v611
        %v615 = vshrl.u32 2475754826, %v612
        %v616 = vor.u32 %v614, %v615
        %v617 = vshll.u32 2475754826, %v611
        %v618 = vshrl.u32 2131351028, %v612
        %v619 = vor.u32 %v617, %v618
        %v620 = vshll.u32 2131351028, %v611
        %v621 = vshrl.u32 2102212464, %v612
        %v622 = vor.u32 %v620, %v621
        %v623 = vshll.u32 2102212464, %v611
        %v624 = vshrl.u32 920167782, %v612
        %v625 = vor.u32 %v623, %v624
        %v626 = vshll.u32 920167782, %v611
        %v627 = vshrl.u32 1326507024, %v612
        %v628 = vor.u32 %v626, %v627
        %vm629 = vcmp.lt.s32.totalorder %v610, 1
        %vm630 = vcmp.lt.s32.totalorder %v610, 2
        %vm631 = vcmp.lt.s32.totalorder %v610, 3
        %vm632 = vcmp.lt.s32.totalorder %v610, 4
        %v633 = vsel %vm629, %v613, %v616
        %v634 = vsel %vm632, %v622, 2102212464
        %v635 = vsel %vm631, %v619, %v634
        %v636 = vsel %vm630, %v633, %v635
        %v637 = vsel %vm629, %v616, %v619
        %v638 = vsel %vm632, %v625, 920167782
        %v639 = vsel %vm631, %v622, %v638
        %v640 = vsel %vm630, %v637, %v639
        %v641 = vsel %vm629, %v619, %v622
        %v642 = vsel %vm632, %v628, 1326507024
        %v643 = vsel %vm631, %v625, %v642
        %v644 = vsel %vm630, %v641, %v643
        %v645 = vshll.u32 %v605, 8
        %v646 = vmul.u32.u64.compose %v645, %v644
        %v647 = vextract.low.u32 %v646
        %v648 = vextract.high.u32 %v646
        %v649 = vmul.u32.u64.compose %v645, %v640
        %v650 = vextract.low.u32 %v649
        %v651 = vextract.high.u32 %v649
        %v652 = vmul.u32 %v645, %v636
        %v653 = vadd.s32 %v648, %v650
        %vm654 = vc.u32 %v648, %v650
        %v655 = vadd.s32 %v651, 1
        %v656 = vsel %vm654, %v655, %v651
        %v657 = vadd.s32 %v652, %v656
        %v658 = vadd.s32 %v657, 536870912
        %v659 = vshrl.u32 %v658, 30
        %v660 = vshll.u32 %v659, 30
        %v661 = vsub.s32 %v657, %v660
        %vm662 = vcmp.lt.s32.totalorder %v661, 0
        %v663 = vsub.s32 0, %v661
        %v664 = vsel %vm662, %v663, %v661
        %v665 = vclz %v664
        %v666 = vsub.s32 %v665, 2
        %vm667 = vcmp.gt.s32.totalorder 0, %v666
        %v668 = vsel %vm667, 0, %v666
        %v669 = vsub.s32 32, %v668
        %v670 = vshll.u32 %v661, %v668
        %v671 = vshrl.u32 %v653, %v669
        %v672 = vor.u32 %v670, %v671
        %v673 = vsub.s32 4294967266, %v668
        %v674 = vadd.s32 %v673, 127
        %v675 = vshll.u32 %v674, 23
        %v676 = vor.u32 4788187, %v675
        %v677 = vand.u32 2147483647, %v676
        %v679 = vcvt.s32.f32 %v672
        %v680 = vmul.f32 %v679, %v677
        %v681 = vxor.u32 %v680, 2147483648
        %v682 = vsel %vm599, %v681, %v680
        %v683 = vsub.s32 4, %v659
        %v684 = vsel %vm599, %v683, %v659
        %v685 = vsel %vm598, %v373, %v682
        %v686 = vsel %vm598, 0, %v684
        %v687 = vcosq.f32.pop %v685
        %v688 = vsinq.f32.pop %v685
        %vm689 = vweird.f32 %v373
        %v690 = vadd.s32 %v686, 3
        %v691 = vand.u32 %v690, 3
        %vm692 = vcmp.lt.s32.totalorder %v691, 2
        %vm693 = vcmp.eq.s32.totalorder %v691, 0
        %v694 = vxor.u32 %v688, 2147483648
        %v695 = vsel %vm693, %v687, %v694
        %vm696 = vcmp.eq.s32.totalorder %v691, 2
        %v697 = vxor.u32 %v687, 2147483648
        %v698 = vsel %vm696, %v697, %v688
        %v699 = vsel %vm692, %v695, %v698
        %v700 = vsel %vm689, nan, %v699
        %v701 = vand.u32 2147483647, %v375
        %vm702 = vcmp.le.f32.partialorder %v701, 0.7853982
        %vm703 = vcmp.lt.s32.totalorder %v375, 0
        %v704 = vand.u32 %v375, 2139095040
        %v705 = vshrl.u32 %v704, 23
        %v706 = vsub.s32 %v705, 127
        %v707 = vand.u32 2147483647, %v375
        %v708 = vand.u32 %v707, 8388607
        %v709 = vor.u32 %v708, 8388608
        %v710 = vsub.s32 0, %v709
        %v711 = vadd.s32 %v706, 1
        %vm712 = vcmp.gt.s32.totalorder %v711, 0
        %v713 = vsel %vm712, %v711, 0
        %v714 = vshrl.u32 %v713, 5
        %v715 = vand.u32 %v713, 31
        %v716 = vsub.s32 32, %v715
        %v717 = vshrl.u32 683565275, %v716
        %v718 = vshll.u32 683565275, %v715
        %v719 = vshrl.u32 2475754826, %v716
        %v720 = vor.u32 %v718, %v719
        %v721 = vshll.u32 2475754826, %v715
        %v722 = vshrl.u32 2131351028, %v716
        %v723 = vor.u32 %v721, %v722
        %v724 = vshll.u32 2131351028, %v715
        %v725 = vshrl.u32 2102212464, %v716
        %v726 = vor.u32 %v724, %v725
        %v727 = vshll.u32 2102212464, %v715
        %v728 = vshrl.u32 920167782, %v716
        %v729 = vor.u32 %v727, %v728
        %v730 = vshll.u32 920167782, %v715
        %v731 = vshrl.u32 1326507024, %v716
        %v732 = vor.u32 %v730, %v731
        %vm733 = vcmp.lt.s32.totalorder %v714, 1
        %vm734 = vcmp.lt.s32.totalorder %v714, 2
        %vm735 = vcmp.lt.s32.totalorder %v714, 3
        %vm736 = vcmp.lt.s32.totalorder %v714, 4
        %v737 = vsel %vm733, %v717, %v720
        %v738 = vsel %vm736, %v726, 2102212464
        %v739 = vsel %vm735, %v723, %v738
        %v740 = vsel %vm734, %v737, %v739
        %v741 = vsel %vm733, %v720, %v723
        %v742 = vsel %vm736, %v729, 920167782
        %v743 = vsel %vm735, %v726, %v742
        %v744 = vsel %vm734, %v741, %v743
        %v745 = vsel %vm733, %v723, %v726
        %v746 = vsel %vm736, %v732, 1326507024
        %v747 = vsel %vm735, %v729, %v746
        %v748 = vsel %vm734, %v745, %v747
        %v749 = vshll.u32 %v709, 8
        %v750 = vmul.u32.u64.compose %v749, %v748
        %v751 = vextract.low.u32 %v750
        %v752 = vextract.high.u32 %v750
        %v753 = vmul.u32.u64.compose %v749, %v744
        %v754 = vextract.low.u32 %v753
        %v755 = vextract.high.u32 %v753
        %v756 = vmul.u32 %v749, %v740
        %v757 = vadd.s32 %v752, %v754
        %vm758 = vc.u32 %v752, %v754
        %v759 = vadd.s32 %v755, 1
        %v760 = vsel %vm758, %v759, %v755
        %v761 = vadd.s32 %v756, %v760
        %v762 = vadd.s32 %v761, 536870912
        %v763 = vshrl.u32 %v762, 30
        %v764 = vshll.u32 %v763, 30
        %v765 = vsub.s32 %v761, %v764
        %vm766 = vcmp.lt.s32.totalorder %v765, 0
        %v767 = vsub.s32 0, %v765
        %v768 = vsel %vm766, %v767, %v765
        %v769 = vclz %v768
        %v770 = vsub.s32 %v769, 2
        %vm771 = vcmp.gt.s32.totalorder 0, %v770
        %v772 = vsel %vm771, 0, %v770
        %v773 = vsub.s32 32, %v772
        %v774 = vshll.u32 %v765, %v772
        %v775 = vshrl.u32 %v757, %v773
        %v776 = vor.u32 %v774, %v775
        %v777 = vsub.s32 4294967266, %v772
        %v778 = vadd.s32 %v777, 127
        %v779 = vshll.u32 %v778, 23
        %v780 = vor.u32 4788187, %v779
        %v781 = vand.u32 2147483647, %v780
        %v783 = vcvt.s32.f32 %v776
        %v784 = vmul.f32 %v783, %v781
        %v785 = vxor.u32 %v784, 2147483648
        %v786 = vsel %vm703, %v785, %v784
        %v787 = vsub.s32 4, %v763
        %v788 = vsel %vm703, %v787, %v763
        %v789 = vsel %vm702, %v375, %v786
        %v790 = vsel %vm702, 0, %v788
        %v791 = vcosq.f32.pop %v789
        %v792 = vsinq.f32.pop %v789
        %vm793 = vweird.f32 %v375
        %v794 = vadd.s32 %v790, 3
        %v795 = vand.u32 %v794, 3
        %vm796 = vcmp.lt.s32.totalorder %v795, 2
        %vm797 = vcmp.eq.s32.totalorder %v795, 0
        %v798 = vxor.u32 %v792, 2147483648
        %v799 = vsel %vm797, %v791, %v798
        %vm800 = vcmp.eq.s32.totalorder %v795, 2
        %v801 = vxor.u32 %v791, 2147483648
        %v802 = vsel %vm800, %v801, %v792
        %v803 = vsel %vm796, %v799, %v802
        %v804 = vsel %vm793, nan, %v803
        %v805 = vand.u32 2147483647, %v379
        %vm806 = vcmp.le.f32.partialorder %v805, 0.7853982
        %vm807 = vcmp.lt.s32.totalorder %v379, 0
        %v808 = vand.u32 %v379, 2139095040
        %v809 = vshrl.u32 %v808, 23
        %v810 = vsub.s32 %v809, 127
        %v811 = vand.u32 2147483647, %v379
        %v812 = vand.u32 %v811, 8388607
        %v813 = vor.u32 %v812, 8388608
        %v814 = vsub.s32 0, %v813
        %v815 = vadd.s32 %v810, 1
        %vm816 = vcmp.gt.s32.totalorder %v815, 0
        %v817 = vsel %vm816, %v815, 0
        %v818 = vshrl.u32 %v817, 5
        %v819 = vand.u32 %v817, 31
        %v820 = vsub.s32 32, %v819
        %v821 = vshrl.u32 683565275, %v820
        %v822 = vshll.u32 683565275, %v819
        %v823 = vshrl.u32 2475754826, %v820
        %v824 = vor.u32 %v822, %v823
        %v825 = vshll.u32 2475754826, %v819
        %v826 = vshrl.u32 2131351028, %v820
        %v827 = vor.u32 %v825, %v826
        %v828 = vshll.u32 2131351028, %v819
        %v829 = vshrl.u32 2102212464, %v820
        %v830 = vor.u32 %v828, %v829
        %v831 = vshll.u32 2102212464, %v819
        %v832 = vshrl.u32 920167782, %v820
        %v833 = vor.u32 %v831, %v832
        %v834 = vshll.u32 920167782, %v819
        %v835 = vshrl.u32 1326507024, %v820
        %v836 = vor.u32 %v834, %v835
        %vm837 = vcmp.lt.s32.totalorder %v818, 1
        %vm838 = vcmp.lt.s32.totalorder %v818, 2
        %vm839 = vcmp.lt.s32.totalorder %v818, 3
        %vm840 = vcmp.lt.s32.totalorder %v818, 4
        %v841 = vsel %vm837, %v821, %v824
        %v842 = vsel %vm840, %v830, 2102212464
        %v843 = vsel %vm839, %v827, %v842
        %v844 = vsel %vm838, %v841, %v843
        %v845 = vsel %vm837, %v824, %v827
        %v846 = vsel %vm840, %v833, 920167782
        %v847 = vsel %vm839, %v830, %v846
        %v848 = vsel %vm838, %v845, %v847
        %v849 = vsel %vm837, %v827, %v830
        %v850 = vsel %vm840, %v836, 1326507024
        %v851 = vsel %vm839, %v833, %v850
        %v852 = vsel %vm838, %v849, %v851
        %v853 = vshll.u32 %v813, 8
        %v854 = vmul.u32.u64.compose %v853, %v852
        %v855 = vextract.low.u32 %v854
        %v856 = vextract.high.u32 %v854
        %v857 = vmul.u32.u64.compose %v853, %v848
        %v858 = vextract.low.u32 %v857
        %v859 = vextract.high.u32 %v857
        %v860 = vmul.u32 %v853, %v844
        %v861 = vadd.s32 %v856, %v858
        %vm862 = vc.u32 %v856, %v858
        %v863 = vadd.s32 %v859, 1
        %v864 = vsel %vm862, %v863, %v859
        %v865 = vadd.s32 %v860, %v864
        %v866 = vadd.s32 %v865, 536870912
        %v867 = vshrl.u32 %v866, 30
        %v868 = vshll.u32 %v867, 30
        %v869 = vsub.s32 %v865, %v868
        %vm870 = vcmp.lt.s32.totalorder %v869, 0
        %v871 = vsub.s32 0, %v869
        %v872 = vsel %vm870, %v871, %v869
        %v873 = vclz %v872
        %v874 = vsub.s32 %v873, 2
        %vm875 = vcmp.gt.s32.totalorder 0, %v874
        %v876 = vsel %vm875, 0, %v874
        %v877 = vsub.s32 32, %v876
        %v878 = vshll.u32 %v869, %v876
        %v879 = vshrl.u32 %v861, %v877
        %v880 = vor.u32 %v878, %v879
        %v881 = vsub.s32 4294967266, %v876
        %v882 = vadd.s32 %v881, 127
        %v883 = vshll.u32 %v882, 23
        %v884 = vor.u32 4788187, %v883
        %v885 = vand.u32 2147483647, %v884
        %v887 = vcvt.s32.f32 %v880
        %v888 = vmul.f32 %v887, %v885
        %v889 = vxor.u32 %v888, 2147483648
        %v890 = vsel %vm807, %v889, %v888
        %v891 = vsub.s32 4, %v867
        %v892 = vsel %vm807, %v891, %v867
        %v893 = vsel %vm806, %v379, %v890
        %v894 = vsel %vm806, 0, %v892
        %v895 = vcosq.f32.pop %v893
        %v896 = vsinq.f32.pop %v893
        %vm897 = vweird.f32 %v379
        %v898 = vadd.s32 %v894, 3
        %v899 = vand.u32 %v898, 3
        %vm900 = vcmp.lt.s32.totalorder %v899, 2
        %vm901 = vcmp.eq.s32.totalorder %v899, 0
        %v902 = vxor.u32 %v896, 2147483648
        %v903 = vsel %vm901, %v895, %v902
        %vm904 = vcmp.eq.s32.totalorder %v899, 2
        %v905 = vxor.u32 %v895, 2147483648
        %v906 = vsel %vm904, %v905, %v896
        %v907 = vsel %vm900, %v903, %v906
        %v908 = vsel %vm897, nan, %v907
        %v909 = vand.u32 2147483647, %v381
        %vm910 = vcmp.le.f32.partialorder %v909, 0.7853982
        %vm911 = vcmp.lt.s32.totalorder %v381, 0
        %v912 = vand.u32 %v381, 2139095040
        %v913 = vshrl.u32 %v912, 23
        %v914 = vsub.s32 %v913, 127
        %v915 = vand.u32 2147483647, %v381
        %v916 = vand.u32 %v915, 8388607
        %v917 = vor.u32 %v916, 8388608
        %v918 = vsub.s32 0, %v917
        %v919 = vadd.s32 %v914, 1
        %vm920 = vcmp.gt.s32.totalorder %v919, 0
        %v921 = vsel %vm920, %v919, 0
        %v922 = vshrl.u32 %v921, 5
        %v923 = vand.u32 %v921, 31
        %v924 = vsub.s32 32, %v923
        %v925 = vshrl.u32 683565275, %v924
        %v926 = vshll.u32 683565275, %v923
        %v927 = vshrl.u32 2475754826, %v924
        %v928 = vor.u32 %v926, %v927
        %v929 = vshll.u32 2475754826, %v923
        %v930 = vshrl.u32 2131351028, %v924
        %v931 = vor.u32 %v929, %v930
        %v932 = vshll.u32 2131351028, %v923
        %v933 = vshrl.u32 2102212464, %v924
        %v934 = vor.u32 %v932, %v933
        %v935 = vshll.u32 2102212464, %v923
        %v936 = vshrl.u32 920167782, %v924
        %v937 = vor.u32 %v935, %v936
        %v938 = vshll.u32 920167782, %v923
        %v939 = vshrl.u32 1326507024, %v924
        %v940 = vor.u32 %v938, %v939
        %vm941 = vcmp.lt.s32.totalorder %v922, 1
        %vm942 = vcmp.lt.s32.totalorder %v922, 2
        %vm943 = vcmp.lt.s32.totalorder %v922, 3
        %vm944 = vcmp.lt.s32.totalorder %v922, 4
        %v945 = vsel %vm941, %v925, %v928
        %v946 = vsel %vm944, %v934, 2102212464
        %v947 = vsel %vm943, %v931, %v946
        %v948 = vsel %vm942, %v945, %v947
        %v949 = vsel %vm941, %v928, %v931
        %v950 = vsel %vm944, %v937, 920167782
        %v951 = vsel %vm943, %v934, %v950
        %v952 = vsel %vm942, %v949, %v951
        %v953 = vsel %vm941, %v931, %v934
        %v954 = vsel %vm944, %v940, 1326507024
        %v955 = vsel %vm943, %v937, %v954
        %v956 = vsel %vm942, %v953, %v955
        %v957 = vshll.u32 %v917, 8
        %v958 = vmul.u32.u64.compose %v957, %v956
        %v959 = vextract.low.u32 %v958
        %v960 = vextract.high.u32 %v958
        %v961 = vmul.u32.u64.compose %v957, %v952
        %v962 = vextract.low.u32 %v961
        %v963 = vextract.high.u32 %v961
        %v964 = vmul.u32 %v957, %v948
        %v965 = vadd.s32 %v960, %v962
        %vm966 = vc.u32 %v960, %v962
        %v967 = vadd.s32 %v963, 1
        %v968 = vsel %vm966, %v967, %v963
        %v969 = vadd.s32 %v964, %v968
        %v970 = vadd.s32 %v969, 536870912
        %v971 = vshrl.u32 %v970, 30
        %v972 = vshll.u32 %v971, 30
        %v973 = vsub.s32 %v969, %v972
        %vm974 = vcmp.lt.s32.totalorder %v973, 0
        %v975 = vsub.s32 0, %v973
        %v976 = vsel %vm974, %v975, %v973
        %v977 = vclz %v976
        %v978 = vsub.s32 %v977, 2
        %vm979 = vcmp.gt.s32.totalorder 0, %v978
        %v980 = vsel %vm979, 0, %v978
        %v981 = vsub.s32 32, %v980
        %v982 = vshll.u32 %v973, %v980
        %v983 = vshrl.u32 %v965, %v981
        %v984 = vor.u32 %v982, %v983
        %v985 = vsub.s32 4294967266, %v980
        %v986 = vadd.s32 %v985, 127
        %v987 = vshll.u32 %v986, 23
        %v988 = vor.u32 4788187, %v987
        %v989 = vand.u32 2147483647, %v988
        %v991 = vcvt.s32.f32 %v984
        %v992 = vmul.f32 %v991, %v989
        %v993 = vxor.u32 %v992, 2147483648
        %v994 = vsel %vm911, %v993, %v992
        %v995 = vsub.s32 4, %v971
        %v996 = vsel %vm911, %v995, %v971
        %v997 = vsel %vm910, %v381, %v994
        %v998 = vsel %vm910, 0, %v996
        %v999 = vcosq.f32.pop %v997
        %v1000 = vsinq.f32.pop %v997
        %vm1001 = vweird.f32 %v381
        %v1002 = vadd.s32 %v998, 3
        %v1003 = vand.u32 %v1002, 3
        %vm1004 = vcmp.lt.s32.totalorder %v1003, 2
        %vm1005 = vcmp.eq.s32.totalorder %v1003, 0
        %v1006 = vxor.u32 %v1000, 2147483648
        %v1007 = vsel %vm1005, %v999, %v1006
        %vm1008 = vcmp.eq.s32.totalorder %v1003, 2
        %v1009 = vxor.u32 %v999, 2147483648
        %v1010 = vsel %vm1008, %v1009, %v1000
        %v1011 = vsel %vm1004, %v1007, %v1010
        %v1012 = vsel %vm1001, nan, %v1011
        %v1013 = vand.u32 2147483647, %v385
        %vm1014 = vcmp.le.f32.partialorder %v1013, 0.7853982
        %vm1015 = vcmp.lt.s32.totalorder %v385, 0
        %v1016 = vand.u32 %v385, 2139095040
        %v1017 = vshrl.u32 %v1016, 23
        %v1018 = vsub.s32 %v1017, 127
        %v1019 = vand.u32 2147483647, %v385
        %v1020 = vand.u32 %v1019, 8388607
        %v1021 = vor.u32 %v1020, 8388608
        %v1022 = vsub.s32 0, %v1021
        %v1023 = vadd.s32 %v1018, 1
        %vm1024 = vcmp.gt.s32.totalorder %v1023, 0
        %v1025 = vsel %vm1024, %v1023, 0
        %v1026 = vshrl.u32 %v1025, 5
        %v1027 = vand.u32 %v1025, 31
        %v1028 = vsub.s32 32, %v1027
        %v1029 = vshrl.u32 683565275, %v1028
        %v1030 = vshll.u32 683565275, %v1027
        %v1031 = vshrl.u32 2475754826, %v1028
        %v1032 = vor.u32 %v1030, %v1031
        %v1033 = vshll.u32 2475754826, %v1027
        %v1034 = vshrl.u32 2131351028, %v1028
        %v1035 = vor.u32 %v1033, %v1034
        %v1036 = vshll.u32 2131351028, %v1027
        %v1037 = vshrl.u32 2102212464, %v1028
        %v1038 = vor.u32 %v1036, %v1037
        %v1039 = vshll.u32 2102212464, %v1027
        %v1040 = vshrl.u32 920167782, %v1028
        %v1041 = vor.u32 %v1039, %v1040
        %v1042 = vshll.u32 920167782, %v1027
        %v1043 = vshrl.u32 1326507024, %v1028
        %v1044 = vor.u32 %v1042, %v1043
        %vm1045 = vcmp.lt.s32.totalorder %v1026, 1
        %vm1046 = vcmp.lt.s32.totalorder %v1026, 2
        %vm1047 = vcmp.lt.s32.totalorder %v1026, 3
        %vm1048 = vcmp.lt.s32.totalorder %v1026, 4
        %v1049 = vsel %vm1045, %v1029, %v1032
        %v1050 = vsel %vm1048, %v1038, 2102212464
        %v1051 = vsel %vm1047, %v1035, %v1050
        %v1052 = vsel %vm1046, %v1049, %v1051
        %v1053 = vsel %vm1045, %v1032, %v1035
        %v1054 = vsel %vm1048, %v1041, 920167782
        %v1055 = vsel %vm1047, %v1038, %v1054
        %v1056 = vsel %vm1046, %v1053, %v1055
        %v1057 = vsel %vm1045, %v1035, %v1038
        %v1058 = vsel %vm1048, %v1044, 1326507024
        %v1059 = vsel %vm1047, %v1041, %v1058
        %v1060 = vsel %vm1046, %v1057, %v1059
        %v1061 = vshll.u32 %v1021, 8
        %v1062 = vmul.u32.u64.compose %v1061, %v1060
        %v1063 = vextract.low.u32 %v1062
        %v1064 = vextract.high.u32 %v1062
        %v1065 = vmul.u32.u64.compose %v1061, %v1056
        %v1066 = vextract.low.u32 %v1065
        %v1067 = vextract.high.u32 %v1065
        %v1068 = vmul.u32 %v1061, %v1052
        %v1069 = vadd.s32 %v1064, %v1066
        %vm1070 = vc.u32 %v1064, %v1066
        %v1071 = vadd.s32 %v1067, 1
        %v1072 = vsel %vm1070, %v1071, %v1067
        %v1073 = vadd.s32 %v1068, %v1072
        %v1074 = vadd.s32 %v1073, 536870912
        %v1075 = vshrl.u32 %v1074, 30
        %v1076 = vshll.u32 %v1075, 30
        %v1077 = vsub.s32 %v1073, %v1076
        %vm1078 = vcmp.lt.s32.totalorder %v1077, 0
        %v1079 = vsub.s32 0, %v1077
        %v1080 = vsel %vm1078, %v1079, %v1077
        %v1081 = vclz %v1080
        %v1082 = vsub.s32 %v1081, 2
        %vm1083 = vcmp.gt.s32.totalorder 0, %v1082
        %v1084 = vsel %vm1083, 0, %v1082
        %v1085 = vsub.s32 32, %v1084
        %v1086 = vshll.u32 %v1077, %v1084
        %v1087 = vshrl.u32 %v1069, %v1085
        %v1088 = vor.u32 %v1086, %v1087
        %v1089 = vsub.s32 4294967266, %v1084
        %v1090 = vadd.s32 %v1089, 127
        %v1091 = vshll.u32 %v1090, 23
        %v1092 = vor.u32 4788187, %v1091
        %v1093 = vand.u32 2147483647, %v1092
        %v1095 = vcvt.s32.f32 %v1088
        %v1096 = vmul.f32 %v1095, %v1093
        %v1097 = vxor.u32 %v1096, 2147483648
        %v1098 = vsel %vm1015, %v1097, %v1096
        %v1099 = vsub.s32 4, %v1075
        %v1100 = vsel %vm1015, %v1099, %v1075
        %v1101 = vsel %vm1014, %v385, %v1098
        %v1102 = vsel %vm1014, 0, %v1100
        %v1103 = vcosq.f32.pop %v1101
        %v1104 = vsinq.f32.pop %v1101
        %vm1105 = vweird.f32 %v385
        %v1106 = vadd.s32 %v1102, 3
        %v1107 = vand.u32 %v1106, 3
        %vm1108 = vcmp.lt.s32.totalorder %v1107, 2
        %vm1109 = vcmp.eq.s32.totalorder %v1107, 0
        %v1110 = vxor.u32 %v1104, 2147483648
        %v1111 = vsel %vm1109, %v1103, %v1110
        %vm1112 = vcmp.eq.s32.totalorder %v1107, 2
        %v1113 = vxor.u32 %v1103, 2147483648
        %v1114 = vsel %vm1112, %v1113, %v1104
        %v1115 = vsel %vm1108, %v1111, %v1114
        %v1116 = vsel %vm1105, nan, %v1115
        %v1117 = vand.u32 2147483647, %v387
        %vm1118 = vcmp.le.f32.partialorder %v1117, 0.7853982
        %vm1119 = vcmp.lt.s32.totalorder %v387, 0
        %v1120 = vand.u32 %v387, 2139095040
        %v1121 = vshrl.u32 %v1120, 23
        %v1122 = vsub.s32 %v1121, 127
        %v1123 = vand.u32 2147483647, %v387
        %v1124 = vand.u32 %v1123, 8388607
        %v1125 = vor.u32 %v1124, 8388608
        %v1126 = vsub.s32 0, %v1125
        %v1127 = vadd.s32 %v1122, 1
        %vm1128 = vcmp.gt.s32.totalorder %v1127, 0
        %v1129 = vsel %vm1128, %v1127, 0
        %v1130 = vshrl.u32 %v1129, 5
        %v1131 = vand.u32 %v1129, 31
        %v1132 = vsub.s32 32, %v1131
        %v1133 = vshrl.u32 683565275, %v1132
        %v1134 = vshll.u32 683565275, %v1131
        %v1135 = vshrl.u32 2475754826, %v1132
        %v1136 = vor.u32 %v1134, %v1135
        %v1137 = vshll.u32 2475754826, %v1131
        %v1138 = vshrl.u32 2131351028, %v1132
        %v1139 = vor.u32 %v1137, %v1138
        %v1140 = vshll.u32 2131351028, %v1131
        %v1141 = vshrl.u32 2102212464, %v1132
        %v1142 = vor.u32 %v1140, %v1141
        %v1143 = vshll.u32 2102212464, %v1131
        %v1144 = vshrl.u32 920167782, %v1132
        %v1145 = vor.u32 %v1143, %v1144
        %v1146 = vshll.u32 920167782, %v1131
        %v1147 = vshrl.u32 1326507024, %v1132
        %v1148 = vor.u32 %v1146, %v1147
        %vm1149 = vcmp.lt.s32.totalorder %v1130, 1
        %vm1150 = vcmp.lt.s32.totalorder %v1130, 2
        %vm1151 = vcmp.lt.s32.totalorder %v1130, 3
        %vm1152 = vcmp.lt.s32.totalorder %v1130, 4
        %v1153 = vsel %vm1149, %v1133, %v1136
        %v1154 = vsel %vm1152, %v1142, 2102212464
        %v1155 = vsel %vm1151, %v1139, %v1154
        %v1156 = vsel %vm1150, %v1153, %v1155
        %v1157 = vsel %vm1149, %v1136, %v1139
        %v1158 = vsel %vm1152, %v1145, 920167782
        %v1159 = vsel %vm1151, %v1142, %v1158
        %v1160 = vsel %vm1150, %v1157, %v1159
        %v1161 = vsel %vm1149, %v1139, %v1142
        %v1162 = vsel %vm1152, %v1148, 1326507024
        %v1163 = vsel %vm1151, %v1145, %v1162
        %v1164 = vsel %vm1150, %v1161, %v1163
        %v1165 = vshll.u32 %v1125, 8
        %v1166 = vmul.u32.u64.compose %v1165, %v1164
        %v1167 = vextract.low.u32 %v1166
        %v1168 = vextract.high.u32 %v1166
        %v1169 = vmul.u32.u64.compose %v1165, %v1160
        %v1170 = vextract.low.u32 %v1169
        %v1171 = vextract.high.u32 %v1169
        %v1172 = vmul.u32 %v1165, %v1156
        %v1173 = vadd.s32 %v1168, %v1170
        %vm1174 = vc.u32 %v1168, %v1170
        %v1175 = vadd.s32 %v1171, 1
        %v1176 = vsel %vm1174, %v1175, %v1171
        %v1177 = vadd.s32 %v1172, %v1176
        %v1178 = vadd.s32 %v1177, 536870912
        %v1179 = vshrl.u32 %v1178, 30
        %v1180 = vshll.u32 %v1179, 30
        %v1181 = vsub.s32 %v1177, %v1180
        %vm1182 = vcmp.lt.s32.totalorder %v1181, 0
        %v1183 = vsub.s32 0, %v1181
        %v1184 = vsel %vm1182, %v1183, %v1181
        %v1185 = vclz %v1184
        %v1186 = vsub.s32 %v1185, 2
        %vm1187 = vcmp.gt.s32.totalorder 0, %v1186
        %v1188 = vsel %vm1187, 0, %v1186
        %v1189 = vsub.s32 32, %v1188
        %v1190 = vshll.u32 %v1181, %v1188
        %v1191 = vshrl.u32 %v1173, %v1189
        %v1192 = vor.u32 %v1190, %v1191
        %v1193 = vsub.s32 4294967266, %v1188
        %v1194 = vadd.s32 %v1193, 127
        %v1195 = vshll.u32 %v1194, 23
        %v1196 = vor.u32 4788187, %v1195
        %v1197 = vand.u32 2147483647, %v1196
        %v1199 = vcvt.s32.f32 %v1192
        %v1200 = vmul.f32 %v1199, %v1197
        %v1201 = vxor.u32 %v1200, 2147483648
        %v1202 = vsel %vm1119, %v1201, %v1200
        %v1203 = vsub.s32 4, %v1179
        %v1204 = vsel %vm1119, %v1203, %v1179
        %v1205 = vsel %vm1118, %v387, %v1202
        %v1206 = vsel %vm1118, 0, %v1204
        %v1207 = vcosq.f32.pop %v1205
        %v1208 = vsinq.f32.pop %v1205
        %vm1209 = vweird.f32 %v387
        %v1210 = vadd.s32 %v1206, 3
        %v1211 = vand.u32 %v1210, 3
        %vm1212 = vcmp.lt.s32.totalorder %v1211, 2
        %vm1213 = vcmp.eq.s32.totalorder %v1211, 0
        %v1214 = vxor.u32 %v1208, 2147483648
        %v1215 = vsel %vm1213, %v1207, %v1214
        %vm1216 = vcmp.eq.s32.totalorder %v1211, 2
        %v1217 = vxor.u32 %v1207, 2147483648
        %v1218 = vsel %vm1216, %v1217, %v1208
        %v1219 = vsel %vm1212, %v1215, %v1218
        %v1220 = vsel %vm1209, nan, %v1219
        %v1221 = vld [vmem:[%s2] sm:$0xff]
        %v1222 = vld [vmem:[%s2 + $0x8] sm:$0xff]
        %v1223 = vld [vmem:[%s2 + $0x10] sm:$0xff]
        %v1224 = vld [vmem:[%s2 + $0x18] sm:$0xff]
        %vm1225 = vcmask 261120
        %v1227 = vsel %vm1225, %v1221, 0
        %v1230 = vsel %vm1225, %v1222, 0
        %v1233 = vsel %vm1225, %v1223, 0
        %v1236 = vsel %vm1225, %v1224, 0
        %1238 = vmatprep.subr.mxu0 0.0
        %1239 = vmatpush1.msra.mxu0 0.0
        %1240 = vmatprep.subr.mxu0 0.0
        %1241 = vmatpush1.msra.mxu0 0.0
        %1242 = vmatprep.subr.mxu0 0.0
        %1243 = vmatpush1.msra.mxu0 0.0
        %1244 = vmatprep.subr.mxu0 0.0
        %1245 = vmatpush1.msra.mxu0 0.0
        %1246 = vmatprep.subr.mxu0 0.0
        %1247 = vmatpush1.msra.mxu0 0.0
        %1248 = vmatprep.subr.mxu0 0.0
        %1249 = vmatpush1.msra.mxu0 0.0
        %1250 = vmatprep.subr.mxu0 0.0
        %1251 = vmatpush1.msra.mxu0 0.0
        %1252 = vmatprep.subr.mxu0 0.0
        %1253 = vmatpush1.msra.mxu0 0.0
        %1254 = vmatprep.subr.mxu0 0.0
        %1255 = vmatpush1.msra.mxu0 0.0
        %1256 = vmatprep.subr.mxu0 0.0
        %1257 = vmatpush1.msra.mxu0 0.0
        %1258 = vmatprep.subr.mxu0 0.0
        %1259 = vmatpush1.msra.mxu0 0.0
        %1260 = vmatprep.subr.mxu0 0.0
        %1261 = vmatpush1.msra.mxu0 0.0
        %1262 = vmatprep.subr.mxu0 %v1220
        %1263 = vmatpush1.msra.mxu0 %v1116
        %1264 = vmatprep.subr.mxu0 %v1012
        %1265 = vmatpush1.msra.mxu0 %v908
        %1266 = vmatprep.subr.mxu0 %v804
        %1267 = vmatpush1.msra.mxu0 %v700
        %1268 = vmatprep.subr.mxu0 %v596
        %1269 = vmatpush1.msra.mxu0 %v492
        %1270 = vmatprep.subr.mxu0 0.0
        %1271 = vmatpush2.msra.mxu0 0.0
        %1272 = vmatprep.subr.mxu0 0.0
        %1273 = vmatpush2.msra.mxu0 0.0
        %1274 = vmatprep.subr.mxu0 0.0
        %1275 = vmatpush2.msra.mxu0 0.0
        %1276 = vmatprep.subr.mxu0 0.0
        %1277 = vmatpush2.msra.mxu0 0.0
        %1278 = vmatprep.subr.mxu0 0.0
        %1279 = vmatpush2.msra.mxu0 0.0
        %1280 = vmatprep.subr.mxu0 0.0
        %1281 = vmatpush2.msra.mxu0 0.0
        %1282 = vmatprep.subr.mxu0 0.0
        %1283 = vmatpush2.msra.mxu0 0.0
        %1284 = vmatprep.subr.mxu0 0.0
        %1285 = vmatpush2.msra.mxu0 0.0
        %1286 = vmatprep.subr.mxu0 0.0
        %1287 = vmatpush2.msra.mxu0 0.0
        %1288 = vmatprep.subr.mxu0 0.0
        %1289 = vmatpush2.msra.mxu0 0.0
        %1290 = vmatprep.subr.mxu0 0.0
        %1291 = vmatpush2.msra.mxu0 0.0
        %1292 = vmatprep.subr.mxu0 0.0
        %1293 = vmatpush2.msra.mxu0 0.0
        %1294 = vmatprep.subr.mxu0 0.0
        %1295 = vmatpush2.msra.mxu0 0.0
        %1296 = vmatprep.subr.mxu0 0.0
        %1297 = vmatpush2.msra.mxu0 0.0
        %1298 = vmatprep.subr.mxu0 0.0
        %1299 = vmatpush2.msra.mxu0 0.0
        %1300 = vmatprep.subr.mxu0 0.0
        %1301 = vmatpush2.msra.mxu0 0.0
        %1302 = vmatprep.mubr.f32.mxu0 0.0
        %1303 = vmatmul.mubr.f32.gmra.mxu0 %v1227
        %v1304 = vpop.f32.mrf.mxu0
        %v1305 = vadd.f32 0.0, %v1304
        %v1306 = vpop.f32.mrf.mxu0
        %v1307 = vadd.f32 0.0, %v1306
        %1308 = vmatprep.mubr.f32.mxu0 0.0
        %1309 = vmatmul.mubr.f32.gmra.mxu0 %v1230
        %v1310 = vpop.f32.mrf.mxu0
        %v1311 = vadd.f32 0.0, %v1310
        %v1312 = vpop.f32.mrf.mxu0
        %v1313 = vadd.f32 0.0, %v1312
        %1314 = vmatprep.mubr.f32.mxu0 0.0
        %1315 = vmatmul.mubr.f32.gmra.mxu0 %v1233
        %v1316 = vpop.f32.mrf.mxu0
        %v1317 = vadd.f32 0.0, %v1316
        %v1318 = vpop.f32.mrf.mxu0
        %v1319 = vadd.f32 0.0, %v1318
        %1320 = vmatprep.mubr.f32.mxu0 0.0
        %1321 = vmatmul.mubr.f32.gmra.mxu0 %v1236
        %v1322 = vpop.f32.mrf.mxu0
        %v1323 = vadd.f32 0.0, %v1322
        %v1324 = vpop.f32.mrf.mxu0
        %v1325 = vadd.f32 0.0, %v1324
        %1326 = vdwg.mxu0
        %v1327 = vand.u32 2147483647, %v1305
        %vm1328 = vcmp.le.f32.partialorder %v1327, 0.7853982
        %vm1329 = vcmp.lt.s32.totalorder %v1305, 0
        %v1330 = vand.u32 %v1305, 2139095040
        %v1331 = vshrl.u32 %v1330, 23
        %v1332 = vsub.s32 %v1331, 127
        %v1333 = vand.u32 2147483647, %v1305
        %v1334 = vand.u32 %v1333, 8388607
        %v1335 = vor.u32 %v1334, 8388608
        %v1336 = vsub.s32 0, %v1335
        %v1337 = vadd.s32 %v1332, 1
        %vm1338 = vcmp.gt.s32.totalorder %v1337, 0
        %v1339 = vsel %vm1338, %v1337, 0
        %v1340 = vshrl.u32 %v1339, 5
        %v1341 = vand.u32 %v1339, 31
        %v1342 = vsub.s32 32, %v1341
        %v1343 = vshrl.u32 683565275, %v1342
        %v1344 = vshll.u32 683565275, %v1341
        %v1345 = vshrl.u32 2475754826, %v1342
        %v1346 = vor.u32 %v1344, %v1345
        %v1347 = vshll.u32 2475754826, %v1341
        %v1348 = vshrl.u32 2131351028, %v1342
        %v1349 = vor.u32 %v1347, %v1348
        %v1350 = vshll.u32 2131351028, %v1341
        %v1351 = vshrl.u32 2102212464, %v1342
        %v1352 = vor.u32 %v1350, %v1351
        %v1353 = vshll.u32 2102212464, %v1341
        %v1354 = vshrl.u32 920167782, %v1342
        %v1355 = vor.u32 %v1353, %v1354
        %v1356 = vshll.u32 920167782, %v1341
        %v1357 = vshrl.u32 1326507024, %v1342
        %v1358 = vor.u32 %v1356, %v1357
        %vm1359 = vcmp.lt.s32.totalorder %v1340, 1
        %vm1360 = vcmp.lt.s32.totalorder %v1340, 2
        %vm1361 = vcmp.lt.s32.totalorder %v1340, 3
        %vm1362 = vcmp.lt.s32.totalorder %v1340, 4
        %v1363 = vsel %vm1359, %v1343, %v1346
        %v1364 = vsel %vm1362, %v1352, 2102212464
        %v1365 = vsel %vm1361, %v1349, %v1364
        %v1366 = vsel %vm1360, %v1363, %v1365
        %v1367 = vsel %vm1359, %v1346, %v1349
        %v1368 = vsel %vm1362, %v1355, 920167782
        %v1369 = vsel %vm1361, %v1352, %v1368
        %v1370 = vsel %vm1360, %v1367, %v1369
        %v1371 = vsel %vm1359, %v1349, %v1352
        %v1372 = vsel %vm1362, %v1358, 1326507024
        %v1373 = vsel %vm1361, %v1355, %v1372
        %v1374 = vsel %vm1360, %v1371, %v1373
        %v1375 = vshll.u32 %v1335, 8
        %v1376 = vmul.u32.u64.compose %v1375, %v1374
        %v1377 = vextract.low.u32 %v1376
        %v1378 = vextract.high.u32 %v1376
        %v1379 = vmul.u32.u64.compose %v1375, %v1370
        %v1380 = vextract.low.u32 %v1379
        %v1381 = vextract.high.u32 %v1379
        %v1382 = vmul.u32 %v1375, %v1366
        %v1383 = vadd.s32 %v1378, %v1380
        %vm1384 = vc.u32 %v1378, %v1380
        %v1385 = vadd.s32 %v1381, 1
        %v1386 = vsel %vm1384, %v1385, %v1381
        %v1387 = vadd.s32 %v1382, %v1386
        %v1388 = vadd.s32 %v1387, 536870912
        %v1389 = vshrl.u32 %v1388, 30
        %v1390 = vshll.u32 %v1389, 30
        %v1391 = vsub.s32 %v1387, %v1390
        %vm1392 = vcmp.lt.s32.totalorder %v1391, 0
        %v1393 = vsub.s32 0, %v1391
        %v1394 = vsel %vm1392, %v1393, %v1391
        %v1395 = vclz %v1394
        %v1396 = vsub.s32 %v1395, 2
        %vm1397 = vcmp.gt.s32.totalorder 0, %v1396
        %v1398 = vsel %vm1397, 0, %v1396
        %v1399 = vsub.s32 32, %v1398
        %v1400 = vshll.u32 %v1391, %v1398
        %v1401 = vshrl.u32 %v1383, %v1399
        %v1402 = vor.u32 %v1400, %v1401
        %v1403 = vsub.s32 4294967266, %v1398
        %v1404 = vadd.s32 %v1403, 127
        %v1405 = vshll.u32 %v1404, 23
        %v1406 = vor.u32 4788187, %v1405
        %v1407 = vand.u32 2147483647, %v1406
        %v1409 = vcvt.s32.f32 %v1402
        %v1410 = vmul.f32 %v1409, %v1407
        %v1411 = vxor.u32 %v1410, 2147483648
        %v1412 = vsel %vm1329, %v1411, %v1410
        %v1413 = vsub.s32 4, %v1389
        %v1414 = vsel %vm1329, %v1413, %v1389
        %v1415 = vsel %vm1328, %v1305, %v1412
        %v1416 = vsel %vm1328, 0, %v1414
        %v1417 = vcosq.f32.pop %v1415
        %v1418 = vsinq.f32.pop %v1415
        %vm1419 = vweird.f32 %v1305
        %v1420 = vadd.s32 %v1416, 3
        %v1421 = vand.u32 %v1420, 3
        %vm1422 = vcmp.lt.s32.totalorder %v1421, 2
        %vm1423 = vcmp.eq.s32.totalorder %v1421, 0
        %v1424 = vxor.u32 %v1418, 2147483648
        %v1425 = vsel %vm1423, %v1417, %v1424
        %vm1426 = vcmp.eq.s32.totalorder %v1421, 2
        %v1427 = vxor.u32 %v1417, 2147483648
        %v1428 = vsel %vm1426, %v1427, %v1418
        %v1429 = vsel %vm1422, %v1425, %v1428
        %v1430 = vsel %vm1419, nan, %v1429
        %v1431 = vand.u32 2147483647, %v1307
        %vm1432 = vcmp.le.f32.partialorder %v1431, 0.7853982
        %vm1433 = vcmp.lt.s32.totalorder %v1307, 0
        %v1434 = vand.u32 %v1307, 2139095040
        %v1435 = vshrl.u32 %v1434, 23
        %v1436 = vsub.s32 %v1435, 127
        %v1437 = vand.u32 2147483647, %v1307
        %v1438 = vand.u32 %v1437, 8388607
        %v1439 = vor.u32 %v1438, 8388608
        %v1440 = vsub.s32 0, %v1439
        %v1441 = vadd.s32 %v1436, 1
        %vm1442 = vcmp.gt.s32.totalorder %v1441, 0
        %v1443 = vsel %vm1442, %v1441, 0
        %v1444 = vshrl.u32 %v1443, 5
        %v1445 = vand.u32 %v1443, 31
        %v1446 = vsub.s32 32, %v1445
        %v1447 = vshrl.u32 683565275, %v1446
        %v1448 = vshll.u32 683565275, %v1445
        %v1449 = vshrl.u32 2475754826, %v1446
        %v1450 = vor.u32 %v1448, %v1449
        %v1451 = vshll.u32 2475754826, %v1445
        %v1452 = vshrl.u32 2131351028, %v1446
        %v1453 = vor.u32 %v1451, %v1452
        %v1454 = vshll.u32 2131351028, %v1445
        %v1455 = vshrl.u32 2102212464, %v1446
        %v1456 = vor.u32 %v1454, %v1455
        %v1457 = vshll.u32 2102212464, %v1445
        %v1458 = vshrl.u32 920167782, %v1446
        %v1459 = vor.u32 %v1457, %v1458
        %v1460 = vshll.u32 920167782, %v1445
        %v1461 = vshrl.u32 1326507024, %v1446
        %v1462 = vor.u32 %v1460, %v1461
        %vm1463 = vcmp.lt.s32.totalorder %v1444, 1
        %vm1464 = vcmp.lt.s32.totalorder %v1444, 2
        %vm1465 = vcmp.lt.s32.totalorder %v1444, 3
        %vm1466 = vcmp.lt.s32.totalorder %v1444, 4
        %v1467 = vsel %vm1463, %v1447, %v1450
        %v1468 = vsel %vm1466, %v1456, 2102212464
        %v1469 = vsel %vm1465, %v1453, %v1468
        %v1470 = vsel %vm1464, %v1467, %v1469
        %v1471 = vsel %vm1463, %v1450, %v1453
        %v1472 = vsel %vm1466, %v1459, 920167782
        %v1473 = vsel %vm1465, %v1456, %v1472
        %v1474 = vsel %vm1464, %v1471, %v1473
        %v1475 = vsel %vm1463, %v1453, %v1456
        %v1476 = vsel %vm1466, %v1462, 1326507024
        %v1477 = vsel %vm1465, %v1459, %v1476
        %v1478 = vsel %vm1464, %v1475, %v1477
        %v1479 = vshll.u32 %v1439, 8
        %v1480 = vmul.u32.u64.compose %v1479, %v1478
        %v1481 = vextract.low.u32 %v1480
        %v1482 = vextract.high.u32 %v1480
        %v1483 = vmul.u32.u64.compose %v1479, %v1474
        %v1484 = vextract.low.u32 %v1483
        %v1485 = vextract.high.u32 %v1483
        %v1486 = vmul.u32 %v1479, %v1470
        %v1487 = vadd.s32 %v1482, %v1484
        %vm1488 = vc.u32 %v1482, %v1484
        %v1489 = vadd.s32 %v1485, 1
        %v1490 = vsel %vm1488, %v1489, %v1485
        %v1491 = vadd.s32 %v1486, %v1490
        %v1492 = vadd.s32 %v1491, 536870912
        %v1493 = vshrl.u32 %v1492, 30
        %v1494 = vshll.u32 %v1493, 30
        %v1495 = vsub.s32 %v1491, %v1494
        %vm1496 = vcmp.lt.s32.totalorder %v1495, 0
        %v1497 = vsub.s32 0, %v1495
        %v1498 = vsel %vm1496, %v1497, %v1495
        %v1499 = vclz %v1498
        %v1500 = vsub.s32 %v1499, 2
        %vm1501 = vcmp.gt.s32.totalorder 0, %v1500
        %v1502 = vsel %vm1501, 0, %v1500
        %v1503 = vsub.s32 32, %v1502
        %v1504 = vshll.u32 %v1495, %v1502
        %v1505 = vshrl.u32 %v1487, %v1503
        %v1506 = vor.u32 %v1504, %v1505
        %v1507 = vsub.s32 4294967266, %v1502
        %v1508 = vadd.s32 %v1507, 127
        %v1509 = vshll.u32 %v1508, 23
        %v1510 = vor.u32 4788187, %v1509
        %v1511 = vand.u32 2147483647, %v1510
        %v1513 = vcvt.s32.f32 %v1506
        %v1514 = vmul.f32 %v1513, %v1511
        %v1515 = vxor.u32 %v1514, 2147483648
        %v1516 = vsel %vm1433, %v1515, %v1514
        %v1517 = vsub.s32 4, %v1493
        %v1518 = vsel %vm1433, %v1517, %v1493
        %v1519 = vsel %vm1432, %v1307, %v1516
        %v1520 = vsel %vm1432, 0, %v1518
        %v1521 = vcosq.f32.pop %v1519
        %v1522 = vsinq.f32.pop %v1519
        %vm1523 = vweird.f32 %v1307
        %v1524 = vadd.s32 %v1520, 3
        %v1525 = vand.u32 %v1524, 3
        %vm1526 = vcmp.lt.s32.totalorder %v1525, 2
        %vm1527 = vcmp.eq.s32.totalorder %v1525, 0
        %v1528 = vxor.u32 %v1522, 2147483648
        %v1529 = vsel %vm1527, %v1521, %v1528
        %vm1530 = vcmp.eq.s32.totalorder %v1525, 2
        %v1531 = vxor.u32 %v1521, 2147483648
        %v1532 = vsel %vm1530, %v1531, %v1522
        %v1533 = vsel %vm1526, %v1529, %v1532
        %v1534 = vsel %vm1523, nan, %v1533
        %v1535 = vand.u32 2147483647, %v1311
        %vm1536 = vcmp.le.f32.partialorder %v1535, 0.7853982
        %vm1537 = vcmp.lt.s32.totalorder %v1311, 0
        %v1538 = vand.u32 %v1311, 2139095040
        %v1539 = vshrl.u32 %v1538, 23
        %v1540 = vsub.s32 %v1539, 127
        %v1541 = vand.u32 2147483647, %v1311
        %v1542 = vand.u32 %v1541, 8388607
        %v1543 = vor.u32 %v1542, 8388608
        %v1544 = vsub.s32 0, %v1543
        %v1545 = vadd.s32 %v1540, 1
        %vm1546 = vcmp.gt.s32.totalorder %v1545, 0
        %v1547 = vsel %vm1546, %v1545, 0
        %v1548 = vshrl.u32 %v1547, 5
        %v1549 = vand.u32 %v1547, 31
        %v1550 = vsub.s32 32, %v1549
        %v1551 = vshrl.u32 683565275, %v1550
        %v1552 = vshll.u32 683565275, %v1549
        %v1553 = vshrl.u32 2475754826, %v1550
        %v1554 = vor.u32 %v1552, %v1553
        %v1555 = vshll.u32 2475754826, %v1549
        %v1556 = vshrl.u32 2131351028, %v1550
        %v1557 = vor.u32 %v1555, %v1556
        %v1558 = vshll.u32 2131351028, %v1549
        %v1559 = vshrl.u32 2102212464, %v1550
        %v1560 = vor.u32 %v1558, %v1559
        %v1561 = vshll.u32 2102212464, %v1549
        %v1562 = vshrl.u32 920167782, %v1550
        %v1563 = vor.u32 %v1561, %v1562
        %v1564 = vshll.u32 920167782, %v1549
        %v1565 = vshrl.u32 1326507024, %v1550
        %v1566 = vor.u32 %v1564, %v1565
        %vm1567 = vcmp.lt.s32.totalorder %v1548, 1
        %vm1568 = vcmp.lt.s32.totalorder %v1548, 2
        %vm1569 = vcmp.lt.s32.totalorder %v1548, 3
        %vm1570 = vcmp.lt.s32.totalorder %v1548, 4
        %v1571 = vsel %vm1567, %v1551, %v1554
        %v1572 = vsel %vm1570, %v1560, 2102212464
        %v1573 = vsel %vm1569, %v1557, %v1572
        %v1574 = vsel %vm1568, %v1571, %v1573
        %v1575 = vsel %vm1567, %v1554, %v1557
        %v1576 = vsel %vm1570, %v1563, 920167782
        %v1577 = vsel %vm1569, %v1560, %v1576
        %v1578 = vsel %vm1568, %v1575, %v1577
        %v1579 = vsel %vm1567, %v1557, %v1560
        %v1580 = vsel %vm1570, %v1566, 1326507024
        %v1581 = vsel %vm1569, %v1563, %v1580
        %v1582 = vsel %vm1568, %v1579, %v1581
        %v1583 = vshll.u32 %v1543, 8
        %v1584 = vmul.u32.u64.compose %v1583, %v1582
        %v1585 = vextract.low.u32 %v1584
        %v1586 = vextract.high.u32 %v1584
        %v1587 = vmul.u32.u64.compose %v1583, %v1578
        %v1588 = vextract.low.u32 %v1587
        %v1589 = vextract.high.u32 %v1587
        %v1590 = vmul.u32 %v1583, %v1574
        %v1591 = vadd.s32 %v1586, %v1588
        %vm1592 = vc.u32 %v1586, %v1588
        %v1593 = vadd.s32 %v1589, 1
        %v1594 = vsel %vm1592, %v1593, %v1589
        %v1595 = vadd.s32 %v1590, %v1594
        %v1596 = vadd.s32 %v1595, 536870912
        %v1597 = vshrl.u32 %v1596, 30
        %v1598 = vshll.u32 %v1597, 30
        %v1599 = vsub.s32 %v1595, %v1598
        %vm1600 = vcmp.lt.s32.totalorder %v1599, 0
        %v1601 = vsub.s32 0, %v1599
        %v1602 = vsel %vm1600, %v1601, %v1599
        %v1603 = vclz %v1602
        %v1604 = vsub.s32 %v1603, 2
        %vm1605 = vcmp.gt.s32.totalorder 0, %v1604
        %v1606 = vsel %vm1605, 0, %v1604
        %v1607 = vsub.s32 32, %v1606
        %v1608 = vshll.u32 %v1599, %v1606
        %v1609 = vshrl.u32 %v1591, %v1607
        %v1610 = vor.u32 %v1608, %v1609
        %v1611 = vsub.s32 4294967266, %v1606
        %v1612 = vadd.s32 %v1611, 127
        %v1613 = vshll.u32 %v1612, 23
        %v1614 = vor.u32 4788187, %v1613
        %v1615 = vand.u32 2147483647, %v1614
        %v1617 = vcvt.s32.f32 %v1610
        %v1618 = vmul.f32 %v1617, %v1615
        %v1619 = vxor.u32 %v1618, 2147483648
        %v1620 = vsel %vm1537, %v1619, %v1618
        %v1621 = vsub.s32 4, %v1597
        %v1622 = vsel %vm1537, %v1621, %v1597
        %v1623 = vsel %vm1536, %v1311, %v1620
        %v1624 = vsel %vm1536, 0, %v1622
        %v1625 = vcosq.f32.pop %v1623
        %v1626 = vsinq.f32.pop %v1623
        %vm1627 = vweird.f32 %v1311
        %v1628 = vadd.s32 %v1624, 3
        %v1629 = vand.u32 %v1628, 3
        %vm1630 = vcmp.lt.s32.totalorder %v1629, 2
        %vm1631 = vcmp.eq.s32.totalorder %v1629, 0
        %v1632 = vxor.u32 %v1626, 2147483648
        %v1633 = vsel %vm1631, %v1625, %v1632
        %vm1634 = vcmp.eq.s32.totalorder %v1629, 2
        %v1635 = vxor.u32 %v1625, 2147483648
        %v1636 = vsel %vm1634, %v1635, %v1626
        %v1637 = vsel %vm1630, %v1633, %v1636
        %v1638 = vsel %vm1627, nan, %v1637
        %v1639 = vand.u32 2147483647, %v1313
        %vm1640 = vcmp.le.f32.partialorder %v1639, 0.7853982
        %vm1641 = vcmp.lt.s32.totalorder %v1313, 0
        %v1642 = vand.u32 %v1313, 2139095040
        %v1643 = vshrl.u32 %v1642, 23
        %v1644 = vsub.s32 %v1643, 127
        %v1645 = vand.u32 2147483647, %v1313
        %v1646 = vand.u32 %v1645, 8388607
        %v1647 = vor.u32 %v1646, 8388608
        %v1648 = vsub.s32 0, %v1647
        %v1649 = vadd.s32 %v1644, 1
        %vm1650 = vcmp.gt.s32.totalorder %v1649, 0
        %v1651 = vsel %vm1650, %v1649, 0
        %v1652 = vshrl.u32 %v1651, 5
        %v1653 = vand.u32 %v1651, 31
        %v1654 = vsub.s32 32, %v1653
        %v1655 = vshrl.u32 683565275, %v1654
        %v1656 = vshll.u32 683565275, %v1653
        %v1657 = vshrl.u32 2475754826, %v1654
        %v1658 = vor.u32 %v1656, %v1657
        %v1659 = vshll.u32 2475754826, %v1653
        %v1660 = vshrl.u32 2131351028, %v1654
        %v1661 = vor.u32 %v1659, %v1660
        %v1662 = vshll.u32 2131351028, %v1653
        %v1663 = vshrl.u32 2102212464, %v1654
        %v1664 = vor.u32 %v1662, %v1663
        %v1665 = vshll.u32 2102212464, %v1653
        %v1666 = vshrl.u32 920167782, %v1654
        %v1667 = vor.u32 %v1665, %v1666
        %v1668 = vshll.u32 920167782, %v1653
        %v1669 = vshrl.u32 1326507024, %v1654
        %v1670 = vor.u32 %v1668, %v1669
        %vm1671 = vcmp.lt.s32.totalorder %v1652, 1
        %vm1672 = vcmp.lt.s32.totalorder %v1652, 2
        %vm1673 = vcmp.lt.s32.totalorder %v1652, 3
        %vm1674 = vcmp.lt.s32.totalorder %v1652, 4
        %v1675 = vsel %vm1671, %v1655, %v1658
        %v1676 = vsel %vm1674, %v1664, 2102212464
        %v1677 = vsel %vm1673, %v1661, %v1676
        %v1678 = vsel %vm1672, %v1675, %v1677
        %v1679 = vsel %vm1671, %v1658, %v1661
        %v1680 = vsel %vm1674, %v1667, 920167782
        %v1681 = vsel %vm1673, %v1664, %v1680
        %v1682 = vsel %vm1672, %v1679, %v1681
        %v1683 = vsel %vm1671, %v1661, %v1664
        %v1684 = vsel %vm1674, %v1670, 1326507024
        %v1685 = vsel %vm1673, %v1667, %v1684
        %v1686 = vsel %vm1672, %v1683, %v1685
        %v1687 = vshll.u32 %v1647, 8
        %v1688 = vmul.u32.u64.compose %v1687, %v1686
        %v1689 = vextract.low.u32 %v1688
        %v1690 = vextract.high.u32 %v1688
        %v1691 = vmul.u32.u64.compose %v1687, %v1682
        %v1692 = vextract.low.u32 %v1691
        %v1693 = vextract.high.u32 %v1691
        %v1694 = vmul.u32 %v1687, %v1678
        %v1695 = vadd.s32 %v1690, %v1692
        %vm1696 = vc.u32 %v1690, %v1692
        %v1697 = vadd.s32 %v1693, 1
        %v1698 = vsel %vm1696, %v1697, %v1693
        %v1699 = vadd.s32 %v1694, %v1698
        %v1700 = vadd.s32 %v1699, 536870912
        %v1701 = vshrl.u32 %v1700, 30
        %v1702 = vshll.u32 %v1701, 30
        %v1703 = vsub.s32 %v1699, %v1702
        %vm1704 = vcmp.lt.s32.totalorder %v1703, 0
        %v1705 = vsub.s32 0, %v1703
        %v1706 = vsel %vm1704, %v1705, %v1703
        %v1707 = vclz %v1706
        %v1708 = vsub.s32 %v1707, 2
        %vm1709 = vcmp.gt.s32.totalorder 0, %v1708
        %v1710 = vsel %vm1709, 0, %v1708
        %v1711 = vsub.s32 32, %v1710
        %v1712 = vshll.u32 %v1703, %v1710
        %v1713 = vshrl.u32 %v1695, %v1711
        %v1714 = vor.u32 %v1712, %v1713
        %v1715 = vsub.s32 4294967266, %v1710
        %v1716 = vadd.s32 %v1715, 127
        %v1717 = vshll.u32 %v1716, 23
        %v1718 = vor.u32 4788187, %v1717
        %v1719 = vand.u32 2147483647, %v1718
        %v1721 = vcvt.s32.f32 %v1714
        %v1722 = vmul.f32 %v1721, %v1719
        %v1723 = vxor.u32 %v1722, 2147483648
        %v1724 = vsel %vm1641, %v1723, %v1722
        %v1725 = vsub.s32 4, %v1701
        %v1726 = vsel %vm1641, %v1725, %v1701
        %v1727 = vsel %vm1640, %v1313, %v1724
        %v1728 = vsel %vm1640, 0, %v1726
        %v1729 = vcosq.f32.pop %v1727
        %v1730 = vsinq.f32.pop %v1727
        %vm1731 = vweird.f32 %v1313
        %v1732 = vadd.s32 %v1728, 3
        %v1733 = vand.u32 %v1732, 3
        %vm1734 = vcmp.lt.s32.totalorder %v1733, 2
        %vm1735 = vcmp.eq.s32.totalorder %v1733, 0
        %v1736 = vxor.u32 %v1730, 2147483648
        %v1737 = vsel %vm1735, %v1729, %v1736
        %vm1738 = vcmp.eq.s32.totalorder %v1733, 2
        %v1739 = vxor.u32 %v1729, 2147483648
        %v1740 = vsel %vm1738, %v1739, %v1730
        %v1741 = vsel %vm1734, %v1737, %v1740
        %v1742 = vsel %vm1731, nan, %v1741
        %v1743 = vand.u32 2147483647, %v1317
        %vm1744 = vcmp.le.f32.partialorder %v1743, 0.7853982
        %vm1745 = vcmp.lt.s32.totalorder %v1317, 0
        %v1746 = vand.u32 %v1317, 2139095040
        %v1747 = vshrl.u32 %v1746, 23
        %v1748 = vsub.s32 %v1747, 127
        %v1749 = vand.u32 2147483647, %v1317
        %v1750 = vand.u32 %v1749, 8388607
        %v1751 = vor.u32 %v1750, 8388608
        %v1752 = vsub.s32 0, %v1751
        %v1753 = vadd.s32 %v1748, 1
        %vm1754 = vcmp.gt.s32.totalorder %v1753, 0
        %v1755 = vsel %vm1754, %v1753, 0
        %v1756 = vshrl.u32 %v1755, 5
        %v1757 = vand.u32 %v1755, 31
        %v1758 = vsub.s32 32, %v1757
        %v1759 = vshrl.u32 683565275, %v1758
        %v1760 = vshll.u32 683565275, %v1757
        %v1761 = vshrl.u32 2475754826, %v1758
        %v1762 = vor.u32 %v1760, %v1761
        %v1763 = vshll.u32 2475754826, %v1757
        %v1764 = vshrl.u32 2131351028, %v1758
        %v1765 = vor.u32 %v1763, %v1764
        %v1766 = vshll.u32 2131351028, %v1757
        %v1767 = vshrl.u32 2102212464, %v1758
        %v1768 = vor.u32 %v1766, %v1767
        %v1769 = vshll.u32 2102212464, %v1757
        %v1770 = vshrl.u32 920167782, %v1758
        %v1771 = vor.u32 %v1769, %v1770
        %v1772 = vshll.u32 920167782, %v1757
        %v1773 = vshrl.u32 1326507024, %v1758
        %v1774 = vor.u32 %v1772, %v1773
        %vm1775 = vcmp.lt.s32.totalorder %v1756, 1
        %vm1776 = vcmp.lt.s32.totalorder %v1756, 2
        %vm1777 = vcmp.lt.s32.totalorder %v1756, 3
        %vm1778 = vcmp.lt.s32.totalorder %v1756, 4
        %v1779 = vsel %vm1775, %v1759, %v1762
        %v1780 = vsel %vm1778, %v1768, 2102212464
        %v1781 = vsel %vm1777, %v1765, %v1780
        %v1782 = vsel %vm1776, %v1779, %v1781
        %v1783 = vsel %vm1775, %v1762, %v1765
        %v1784 = vsel %vm1778, %v1771, 920167782
        %v1785 = vsel %vm1777, %v1768, %v1784
        %v1786 = vsel %vm1776, %v1783, %v1785
        %v1787 = vsel %vm1775, %v1765, %v1768
        %v1788 = vsel %vm1778, %v1774, 1326507024
        %v1789 = vsel %vm1777, %v1771, %v1788
        %v1790 = vsel %vm1776, %v1787, %v1789
        %v1791 = vshll.u32 %v1751, 8
        %v1792 = vmul.u32.u64.compose %v1791, %v1790
        %v1793 = vextract.low.u32 %v1792
        %v1794 = vextract.high.u32 %v1792
        %v1795 = vmul.u32.u64.compose %v1791, %v1786
        %v1796 = vextract.low.u32 %v1795
        %v1797 = vextract.high.u32 %v1795
        %v1798 = vmul.u32 %v1791, %v1782
        %v1799 = vadd.s32 %v1794, %v1796
        %vm1800 = vc.u32 %v1794, %v1796
        %v1801 = vadd.s32 %v1797, 1
        %v1802 = vsel %vm1800, %v1801, %v1797
        %v1803 = vadd.s32 %v1798, %v1802
        %v1804 = vadd.s32 %v1803, 536870912
        %v1805 = vshrl.u32 %v1804, 30
        %v1806 = vshll.u32 %v1805, 30
        %v1807 = vsub.s32 %v1803, %v1806
        %vm1808 = vcmp.lt.s32.totalorder %v1807, 0
        %v1809 = vsub.s32 0, %v1807
        %v1810 = vsel %vm1808, %v1809, %v1807
        %v1811 = vclz %v1810
        %v1812 = vsub.s32 %v1811, 2
        %vm1813 = vcmp.gt.s32.totalorder 0, %v1812
        %v1814 = vsel %vm1813, 0, %v1812
        %v1815 = vsub.s32 32, %v1814
        %v1816 = vshll.u32 %v1807, %v1814
        %v1817 = vshrl.u32 %v1799, %v1815
        %v1818 = vor.u32 %v1816, %v1817
        %v1819 = vsub.s32 4294967266, %v1814
        %v1820 = vadd.s32 %v1819, 127
        %v1821 = vshll.u32 %v1820, 23
        %v1822 = vor.u32 4788187, %v1821
        %v1823 = vand.u32 2147483647, %v1822
        %v1825 = vcvt.s32.f32 %v1818
        %v1826 = vmul.f32 %v1825, %v1823
        %v1827 = vxor.u32 %v1826, 2147483648
        %v1828 = vsel %vm1745, %v1827, %v1826
        %v1829 = vsub.s32 4, %v1805
        %v1830 = vsel %vm1745, %v1829, %v1805
        %v1831 = vsel %vm1744, %v1317, %v1828
        %v1832 = vsel %vm1744, 0, %v1830
        %v1833 = vcosq.f32.pop %v1831
        %v1834 = vsinq.f32.pop %v1831
        %vm1835 = vweird.f32 %v1317
        %v1836 = vadd.s32 %v1832, 3
        %v1837 = vand.u32 %v1836, 3
        %vm1838 = vcmp.lt.s32.totalorder %v1837, 2
        %vm1839 = vcmp.eq.s32.totalorder %v1837, 0
        %v1840 = vxor.u32 %v1834, 2147483648
        %v1841 = vsel %vm1839, %v1833, %v1840
        %vm1842 = vcmp.eq.s32.totalorder %v1837, 2
        %v1843 = vxor.u32 %v1833, 2147483648
        %v1844 = vsel %vm1842, %v1843, %v1834
        %v1845 = vsel %vm1838, %v1841, %v1844
        %v1846 = vsel %vm1835, nan, %v1845
        %v1847 = vand.u32 2147483647, %v1319
        %vm1848 = vcmp.le.f32.partialorder %v1847, 0.7853982
        %vm1849 = vcmp.lt.s32.totalorder %v1319, 0
        %v1850 = vand.u32 %v1319, 2139095040
        %v1851 = vshrl.u32 %v1850, 23
        %v1852 = vsub.s32 %v1851, 127
        %v1853 = vand.u32 2147483647, %v1319
        %v1854 = vand.u32 %v1853, 8388607
        %v1855 = vor.u32 %v1854, 8388608
        %v1856 = vsub.s32 0, %v1855
        %v1857 = vadd.s32 %v1852, 1
        %vm1858 = vcmp.gt.s32.totalorder %v1857, 0
        %v1859 = vsel %vm1858, %v1857, 0
        %v1860 = vshrl.u32 %v1859, 5
        %v1861 = vand.u32 %v1859, 31
        %v1862 = vsub.s32 32, %v1861
        %v1863 = vshrl.u32 683565275, %v1862
        %v1864 = vshll.u32 683565275, %v1861
        %v1865 = vshrl.u32 2475754826, %v1862
        %v1866 = vor.u32 %v1864, %v1865
        %v1867 = vshll.u32 2475754826, %v1861
        %v1868 = vshrl.u32 2131351028, %v1862
        %v1869 = vor.u32 %v1867, %v1868
        %v1870 = vshll.u32 2131351028, %v1861
        %v1871 = vshrl.u32 2102212464, %v1862
        %v1872 = vor.u32 %v1870, %v1871
        %v1873 = vshll.u32 2102212464, %v1861
        %v1874 = vshrl.u32 920167782, %v1862
        %v1875 = vor.u32 %v1873, %v1874
        %v1876 = vshll.u32 920167782, %v1861
        %v1877 = vshrl.u32 1326507024, %v1862
        %v1878 = vor.u32 %v1876, %v1877
        %vm1879 = vcmp.lt.s32.totalorder %v1860, 1
        %vm1880 = vcmp.lt.s32.totalorder %v1860, 2
        %vm1881 = vcmp.lt.s32.totalorder %v1860, 3
        %vm1882 = vcmp.lt.s32.totalorder %v1860, 4
        %v1883 = vsel %vm1879, %v1863, %v1866
        %v1884 = vsel %vm1882, %v1872, 2102212464
        %v1885 = vsel %vm1881, %v1869, %v1884
        %v1886 = vsel %vm1880, %v1883, %v1885
        %v1887 = vsel %vm1879, %v1866, %v1869
        %v1888 = vsel %vm1882, %v1875, 920167782
        %v1889 = vsel %vm1881, %v1872, %v1888
        %v1890 = vsel %vm1880, %v1887, %v1889
        %v1891 = vsel %vm1879, %v1869, %v1872
        %v1892 = vsel %vm1882, %v1878, 1326507024
        %v1893 = vsel %vm1881, %v1875, %v1892
        %v1894 = vsel %vm1880, %v1891, %v1893
        %v1895 = vshll.u32 %v1855, 8
        %v1896 = vmul.u32.u64.compose %v1895, %v1894
        %v1897 = vextract.low.u32 %v1896
        %v1898 = vextract.high.u32 %v1896
        %v1899 = vmul.u32.u64.compose %v1895, %v1890
        %v1900 = vextract.low.u32 %v1899
        %v1901 = vextract.high.u32 %v1899
        %v1902 = vmul.u32 %v1895, %v1886
        %v1903 = vadd.s32 %v1898, %v1900
        %vm1904 = vc.u32 %v1898, %v1900
        %v1905 = vadd.s32 %v1901, 1
        %v1906 = vsel %vm1904, %v1905, %v1901
        %v1907 = vadd.s32 %v1902, %v1906
        %v1908 = vadd.s32 %v1907, 536870912
        %v1909 = vshrl.u32 %v1908, 30
        %v1910 = vshll.u32 %v1909, 30
        %v1911 = vsub.s32 %v1907, %v1910
        %vm1912 = vcmp.lt.s32.totalorder %v1911, 0
        %v1913 = vsub.s32 0, %v1911
        %v1914 = vsel %vm1912, %v1913, %v1911
        %v1915 = vclz %v1914
        %v1916 = vsub.s32 %v1915, 2
        %vm1917 = vcmp.gt.s32.totalorder 0, %v1916
        %v1918 = vsel %vm1917, 0, %v1916
        %v1919 = vsub.s32 32, %v1918
        %v1920 = vshll.u32 %v1911, %v1918
        %v1921 = vshrl.u32 %v1903, %v1919
        %v1922 = vor.u32 %v1920, %v1921
        %v1923 = vsub.s32 4294967266, %v1918
        %v1924 = vadd.s32 %v1923, 127
        %v1925 = vshll.u32 %v1924, 23
        %v1926 = vor.u32 4788187, %v1925
        %v1927 = vand.u32 2147483647, %v1926
        %v1929 = vcvt.s32.f32 %v1922
        %v1930 = vmul.f32 %v1929, %v1927
        %v1931 = vxor.u32 %v1930, 2147483648
        %v1932 = vsel %vm1849, %v1931, %v1930
        %v1933 = vsub.s32 4, %v1909
        %v1934 = vsel %vm1849, %v1933, %v1909
        %v1935 = vsel %vm1848, %v1319, %v1932
        %v1936 = vsel %vm1848, 0, %v1934
        %v1937 = vcosq.f32.pop %v1935
        %v1938 = vsinq.f32.pop %v1935
        %vm1939 = vweird.f32 %v1319
        %v1940 = vadd.s32 %v1936, 3
        %v1941 = vand.u32 %v1940, 3
        %vm1942 = vcmp.lt.s32.totalorder %v1941, 2
        %vm1943 = vcmp.eq.s32.totalorder %v1941, 0
        %v1944 = vxor.u32 %v1938, 2147483648
        %v1945 = vsel %vm1943, %v1937, %v1944
        %vm1946 = vcmp.eq.s32.totalorder %v1941, 2
        %v1947 = vxor.u32 %v1937, 2147483648
        %v1948 = vsel %vm1946, %v1947, %v1938
        %v1949 = vsel %vm1942, %v1945, %v1948
        %v1950 = vsel %vm1939, nan, %v1949
        %v1951 = vand.u32 2147483647, %v1323
        %vm1952 = vcmp.le.f32.partialorder %v1951, 0.7853982
        %vm1953 = vcmp.lt.s32.totalorder %v1323, 0
        %v1954 = vand.u32 %v1323, 2139095040
        %v1955 = vshrl.u32 %v1954, 23
        %v1956 = vsub.s32 %v1955, 127
        %v1957 = vand.u32 2147483647, %v1323
        %v1958 = vand.u32 %v1957, 8388607
        %v1959 = vor.u32 %v1958, 8388608
        %v1960 = vsub.s32 0, %v1959
        %v1961 = vadd.s32 %v1956, 1
        %vm1962 = vcmp.gt.s32.totalorder %v1961, 0
        %v1963 = vsel %vm1962, %v1961, 0
        %v1964 = vshrl.u32 %v1963, 5
        %v1965 = vand.u32 %v1963, 31
        %v1966 = vsub.s32 32, %v1965
        %v1967 = vshrl.u32 683565275, %v1966
        %v1968 = vshll.u32 683565275, %v1965
        %v1969 = vshrl.u32 2475754826, %v1966
        %v1970 = vor.u32 %v1968, %v1969
        %v1971 = vshll.u32 2475754826, %v1965
        %v1972 = vshrl.u32 2131351028, %v1966
        %v1973 = vor.u32 %v1971, %v1972
        %v1974 = vshll.u32 2131351028, %v1965
        %v1975 = vshrl.u32 2102212464, %v1966
        %v1976 = vor.u32 %v1974, %v1975
        %v1977 = vshll.u32 2102212464, %v1965
        %v1978 = vshrl.u32 920167782, %v1966
        %v1979 = vor.u32 %v1977, %v1978
        %v1980 = vshll.u32 920167782, %v1965
        %v1981 = vshrl.u32 1326507024, %v1966
        %v1982 = vor.u32 %v1980, %v1981
        %vm1983 = vcmp.lt.s32.totalorder %v1964, 1
        %vm1984 = vcmp.lt.s32.totalorder %v1964, 2
        %vm1985 = vcmp.lt.s32.totalorder %v1964, 3
        %vm1986 = vcmp.lt.s32.totalorder %v1964, 4
        %v1987 = vsel %vm1983, %v1967, %v1970
        %v1988 = vsel %vm1986, %v1976, 2102212464
        %v1989 = vsel %vm1985, %v1973, %v1988
        %v1990 = vsel %vm1984, %v1987, %v1989
        %v1991 = vsel %vm1983, %v1970, %v1973
        %v1992 = vsel %vm1986, %v1979, 920167782
        %v1993 = vsel %vm1985, %v1976, %v1992
        %v1994 = vsel %vm1984, %v1991, %v1993
        %v1995 = vsel %vm1983, %v1973, %v1976
        %v1996 = vsel %vm1986, %v1982, 1326507024
        %v1997 = vsel %vm1985, %v1979, %v1996
        %v1998 = vsel %vm1984, %v1995, %v1997
        %v1999 = vshll.u32 %v1959, 8
        %v2000 = vmul.u32.u64.compose %v1999, %v1998
        %v2001 = vextract.low.u32 %v2000
        %v2002 = vextract.high.u32 %v2000
        %v2003 = vmul.u32.u64.compose %v1999, %v1994
        %v2004 = vextract.low.u32 %v2003
        %v2005 = vextract.high.u32 %v2003
        %v2006 = vmul.u32 %v1999, %v1990
        %v2007 = vadd.s32 %v2002, %v2004
        %vm2008 = vc.u32 %v2002, %v2004
        %v2009 = vadd.s32 %v2005, 1
        %v2010 = vsel %vm2008, %v2009, %v2005
        %v2011 = vadd.s32 %v2006, %v2010
        %v2012 = vadd.s32 %v2011, 536870912
        %v2013 = vshrl.u32 %v2012, 30
        %v2014 = vshll.u32 %v2013, 30
        %v2015 = vsub.s32 %v2011, %v2014
        %vm2016 = vcmp.lt.s32.totalorder %v2015, 0
        %v2017 = vsub.s32 0, %v2015
        %v2018 = vsel %vm2016, %v2017, %v2015
        %v2019 = vclz %v2018
        %v2020 = vsub.s32 %v2019, 2
        %vm2021 = vcmp.gt.s32.totalorder 0, %v2020
        %v2022 = vsel %vm2021, 0, %v2020
        %v2023 = vsub.s32 32, %v2022
        %v2024 = vshll.u32 %v2015, %v2022
        %v2025 = vshrl.u32 %v2007, %v2023
        %v2026 = vor.u32 %v2024, %v2025
        %v2027 = vsub.s32 4294967266, %v2022
        %v2028 = vadd.s32 %v2027, 127
        %v2029 = vshll.u32 %v2028, 23
        %v2030 = vor.u32 4788187, %v2029
        %v2031 = vand.u32 2147483647, %v2030
        %v2033 = vcvt.s32.f32 %v2026
        %v2034 = vmul.f32 %v2033, %v2031
        %v2035 = vxor.u32 %v2034, 2147483648
        %v2036 = vsel %vm1953, %v2035, %v2034
        %v2037 = vsub.s32 4, %v2013
        %v2038 = vsel %vm1953, %v2037, %v2013
        %v2039 = vsel %vm1952, %v1323, %v2036
        %v2040 = vsel %vm1952, 0, %v2038
        %v2041 = vcosq.f32.pop %v2039
        %v2042 = vsinq.f32.pop %v2039
        %vm2043 = vweird.f32 %v1323
        %v2044 = vadd.s32 %v2040, 3
        %v2045 = vand.u32 %v2044, 3
        %vm2046 = vcmp.lt.s32.totalorder %v2045, 2
        %vm2047 = vcmp.eq.s32.totalorder %v2045, 0
        %v2048 = vxor.u32 %v2042, 2147483648
        %v2049 = vsel %vm2047, %v2041, %v2048
        %vm2050 = vcmp.eq.s32.totalorder %v2045, 2
        %v2051 = vxor.u32 %v2041, 2147483648
        %v2052 = vsel %vm2050, %v2051, %v2042
        %v2053 = vsel %vm2046, %v2049, %v2052
        %v2054 = vsel %vm2043, nan, %v2053
        %v2055 = vand.u32 2147483647, %v1325
        %vm2056 = vcmp.le.f32.partialorder %v2055, 0.7853982
        %vm2057 = vcmp.lt.s32.totalorder %v1325, 0
        %v2058 = vand.u32 %v1325, 2139095040
        %v2059 = vshrl.u32 %v2058, 23
        %v2060 = vsub.s32 %v2059, 127
        %v2061 = vand.u32 2147483647, %v1325
        %v2062 = vand.u32 %v2061, 8388607
        %v2063 = vor.u32 %v2062, 8388608
        %v2064 = vsub.s32 0, %v2063
        %v2065 = vadd.s32 %v2060, 1
        %vm2066 = vcmp.gt.s32.totalorder %v2065, 0
        %v2067 = vsel %vm2066, %v2065, 0
        %v2068 = vshrl.u32 %v2067, 5
        %v2069 = vand.u32 %v2067, 31
        %v2070 = vsub.s32 32, %v2069
        %v2071 = vshrl.u32 683565275, %v2070
        %v2072 = vshll.u32 683565275, %v2069
        %v2073 = vshrl.u32 2475754826, %v2070
        %v2074 = vor.u32 %v2072, %v2073
        %v2075 = vshll.u32 2475754826, %v2069
        %v2076 = vshrl.u32 2131351028, %v2070
        %v2077 = vor.u32 %v2075, %v2076
        %v2078 = vshll.u32 2131351028, %v2069
        %v2079 = vshrl.u32 2102212464, %v2070
        %v2080 = vor.u32 %v2078, %v2079
        %v2081 = vshll.u32 2102212464, %v2069
        %v2082 = vshrl.u32 920167782, %v2070
        %v2083 = vor.u32 %v2081, %v2082
        %v2084 = vshll.u32 920167782, %v2069
        %v2085 = vshrl.u32 1326507024, %v2070
        %v2086 = vor.u32 %v2084, %v2085
        %vm2087 = vcmp.lt.s32.totalorder %v2068, 1
        %vm2088 = vcmp.lt.s32.totalorder %v2068, 2
        %vm2089 = vcmp.lt.s32.totalorder %v2068, 3
        %vm2090 = vcmp.lt.s32.totalorder %v2068, 4
        %v2091 = vsel %vm2087, %v2071, %v2074
        %v2092 = vsel %vm2090, %v2080, 2102212464
        %v2093 = vsel %vm2089, %v2077, %v2092
        %v2094 = vsel %vm2088, %v2091, %v2093
        %v2095 = vsel %vm2087, %v2074, %v2077
        %v2096 = vsel %vm2090, %v2083, 920167782
        %v2097 = vsel %vm2089, %v2080, %v2096
        %v2098 = vsel %vm2088, %v2095, %v2097
        %v2099 = vsel %vm2087, %v2077, %v2080
        %v2100 = vsel %vm2090, %v2086, 1326507024
        %v2101 = vsel %vm2089, %v2083, %v2100
        %v2102 = vsel %vm2088, %v2099, %v2101
        %v2103 = vshll.u32 %v2063, 8
        %v2104 = vmul.u32.u64.compose %v2103, %v2102
        %v2105 = vextract.low.u32 %v2104
        %v2106 = vextract.high.u32 %v2104
        %v2107 = vmul.u32.u64.compose %v2103, %v2098
        %v2108 = vextract.low.u32 %v2107
        %v2109 = vextract.high.u32 %v2107
        %v2110 = vmul.u32 %v2103, %v2094
        %v2111 = vadd.s32 %v2106, %v2108
        %vm2112 = vc.u32 %v2106, %v2108
        %v2113 = vadd.s32 %v2109, 1
        %v2114 = vsel %vm2112, %v2113, %v2109
        %v2115 = vadd.s32 %v2110, %v2114
        %v2116 = vadd.s32 %v2115, 536870912
        %v2117 = vshrl.u32 %v2116, 30
        %v2118 = vshll.u32 %v2117, 30
        %v2119 = vsub.s32 %v2115, %v2118
        %vm2120 = vcmp.lt.s32.totalorder %v2119, 0
        %v2121 = vsub.s32 0, %v2119
        %v2122 = vsel %vm2120, %v2121, %v2119
        %v2123 = vclz %v2122
        %v2124 = vsub.s32 %v2123, 2
        %vm2125 = vcmp.gt.s32.totalorder 0, %v2124
        %v2126 = vsel %vm2125, 0, %v2124
        %v2127 = vsub.s32 32, %v2126
        %v2128 = vshll.u32 %v2119, %v2126
        %v2129 = vshrl.u32 %v2111, %v2127
        %v2130 = vor.u32 %v2128, %v2129
        %v2131 = vsub.s32 4294967266, %v2126
        %v2132 = vadd.s32 %v2131, 127
        %v2133 = vshll.u32 %v2132, 23
        %v2134 = vor.u32 4788187, %v2133
        %v2135 = vand.u32 2147483647, %v2134
        %v2137 = vcvt.s32.f32 %v2130
        %v2138 = vmul.f32 %v2137, %v2135
        %v2139 = vxor.u32 %v2138, 2147483648
        %v2140 = vsel %vm2057, %v2139, %v2138
        %v2141 = vsub.s32 4, %v2117
        %v2142 = vsel %vm2057, %v2141, %v2117
        %v2143 = vsel %vm2056, %v1325, %v2140
        %v2144 = vsel %vm2056, 0, %v2142
        %v2145 = vcosq.f32.pop %v2143
        %v2146 = vsinq.f32.pop %v2143
        %vm2147 = vweird.f32 %v1325
        %v2148 = vadd.s32 %v2144, 3
        %v2149 = vand.u32 %v2148, 3
        %vm2150 = vcmp.lt.s32.totalorder %v2149, 2
        %vm2151 = vcmp.eq.s32.totalorder %v2149, 0
        %v2152 = vxor.u32 %v2146, 2147483648
        %v2153 = vsel %vm2151, %v2145, %v2152
        %vm2154 = vcmp.eq.s32.totalorder %v2149, 2
        %v2155 = vxor.u32 %v2145, 2147483648
        %v2156 = vsel %vm2154, %v2155, %v2146
        %v2157 = vsel %vm2150, %v2153, %v2156
        %v2158 = vsel %vm2147, nan, %v2157
        %v2159 = vld [vmem:[#allocation2] sm:$0xff]
        %v2160 = vld [vmem:[#allocation2 + $0x8] sm:$0xff]
        %v2161 = vld [vmem:[#allocation2 + $0x10] sm:$0xff]
        %v2162 = vld [vmem:[#allocation2 + $0x18] sm:$0xff]
        %v2164 = vsel %vm1225, %v2159, 0
        %v2167 = vsel %vm1225, %v2160, 0
        %v2170 = vsel %vm1225, %v2161, 0
        %v2173 = vsel %vm1225, %v2162, 0
        %2175 = vmatprep.subr.mxu0 0.0
        %2176 = vmatpush1.msra.mxu0 0.0
        %2177 = vmatprep.subr.mxu0 0.0
        %2178 = vmatpush1.msra.mxu0 0.0
        %2179 = vmatprep.subr.mxu0 0.0
        %2180 = vmatpush1.msra.mxu0 0.0
        %2181 = vmatprep.subr.mxu0 0.0
        %2182 = vmatpush1.msra.mxu0 0.0
        %2183 = vmatprep.subr.mxu0 0.0
        %2184 = vmatpush1.msra.mxu0 0.0
        %2185 = vmatprep.subr.mxu0 0.0
        %2186 = vmatpush1.msra.mxu0 0.0
        %2187 = vmatprep.subr.mxu0 0.0
        %2188 = vmatpush1.msra.mxu0 0.0
        %2189 = vmatprep.subr.mxu0 0.0
        %2190 = vmatpush1.msra.mxu0 0.0
        %2191 = vmatprep.subr.mxu0 0.0
        %2192 = vmatpush1.msra.mxu0 0.0
        %2193 = vmatprep.subr.mxu0 0.0
        %2194 = vmatpush1.msra.mxu0 0.0
        %2195 = vmatprep.subr.mxu0 0.0
        %2196 = vmatpush1.msra.mxu0 0.0
        %2197 = vmatprep.subr.mxu0 0.0
        %2198 = vmatpush1.msra.mxu0 0.0
        %2199 = vmatprep.subr.mxu0 %v2158
        %2200 = vmatpush1.msra.mxu0 %v2054
        %2201 = vmatprep.subr.mxu0 %v1950
        %2202 = vmatpush1.msra.mxu0 %v1846
        %2203 = vmatprep.subr.mxu0 %v1742
        %2204 = vmatpush1.msra.mxu0 %v1638
        %2205 = vmatprep.subr.mxu0 %v1534
        %2206 = vmatpush1.msra.mxu0 %v1430
        %2207 = vmatprep.subr.mxu0 0.0
        %2208 = vmatpush2.msra.mxu0 0.0
        %2209 = vmatprep.subr.mxu0 0.0
        %2210 = vmatpush2.msra.mxu0 0.0
        %2211 = vmatprep.subr.mxu0 0.0
        %2212 = vmatpush2.msra.mxu0 0.0
        %2213 = vmatprep.subr.mxu0 0.0
        %2214 = vmatpush2.msra.mxu0 0.0
        %2215 = vmatprep.subr.mxu0 0.0
        %2216 = vmatpush2.msra.mxu0 0.0
        %2217 = vmatprep.subr.mxu0 0.0
        %2218 = vmatpush2.msra.mxu0 0.0
        %2219 = vmatprep.subr.mxu0 0.0
        %2220 = vmatpush2.msra.mxu0 0.0
        %2221 = vmatprep.subr.mxu0 0.0
        %2222 = vmatpush2.msra.mxu0 0.0
        %2223 = vmatprep.subr.mxu0 0.0
        %2224 = vmatpush2.msra.mxu0 0.0
        %2225 = vmatprep.subr.mxu0 0.0
        %2226 = vmatpush2.msra.mxu0 0.0
        %2227 = vmatprep.subr.mxu0 0.0
        %2228 = vmatpush2.msra.mxu0 0.0
        %2229 = vmatprep.subr.mxu0 0.0
        %2230 = vmatpush2.msra.mxu0 0.0
        %2231 = vmatprep.subr.mxu0 0.0
        %2232 = vmatpush2.msra.mxu0 0.0
        %2233 = vmatprep.subr.mxu0 0.0
        %2234 = vmatpush2.msra.mxu0 0.0
        %2235 = vmatprep.subr.mxu0 0.0
        %2236 = vmatpush2.msra.mxu0 0.0
        %2237 = vmatprep.subr.mxu0 0.0
        %2238 = vmatpush2.msra.mxu0 0.0
        %2239 = vmatprep.mubr.f32.mxu0 0.0
        %2240 = vmatmul.mubr.f32.gmra.mxu0 %v2164
        %v2241 = vpop.f32.mrf.mxu0
        %v2242 = vadd.f32 0.0, %v2241
        %v2243 = vpop.f32.mrf.mxu0
        %v2244 = vadd.f32 0.0, %v2243
        %2245 = vmatprep.mubr.f32.mxu0 0.0
        %2246 = vmatmul.mubr.f32.gmra.mxu0 %v2167
        %v2247 = vpop.f32.mrf.mxu0
        %v2248 = vadd.f32 0.0, %v2247
        %v2249 = vpop.f32.mrf.mxu0
        %v2250 = vadd.f32 0.0, %v2249
        %2251 = vmatprep.mubr.f32.mxu0 0.0
        %2252 = vmatmul.mubr.f32.gmra.mxu0 %v2170
        %v2253 = vpop.f32.mrf.mxu0
        %v2254 = vadd.f32 0.0, %v2253
        %v2255 = vpop.f32.mrf.mxu0
        %v2256 = vadd.f32 0.0, %v2255
        %2257 = vmatprep.mubr.f32.mxu0 0.0
        %2258 = vmatmul.mubr.f32.gmra.mxu0 %v2173
        %v2259 = vpop.f32.mrf.mxu0
        %v2260 = vadd.f32 0.0, %v2259
        %v2261 = vpop.f32.mrf.mxu0
        %v2262 = vadd.f32 0.0, %v2261
        %2263 = vdwg.mxu0
        %v2264 = vand.u32 2147483647, %v2242
        %vm2265 = vcmp.le.f32.partialorder %v2264, 0.7853982
        %vm2266 = vcmp.lt.s32.totalorder %v2242, 0
        %v2267 = vand.u32 %v2242, 2139095040
        %v2268 = vshrl.u32 %v2267, 23
        %v2269 = vsub.s32 %v2268, 127
        %v2270 = vand.u32 2147483647, %v2242
        %v2271 = vand.u32 %v2270, 8388607
        %v2272 = vor.u32 %v2271, 8388608
        %v2273 = vsub.s32 0, %v2272
        %v2274 = vadd.s32 %v2269, 1
        %vm2275 = vcmp.gt.s32.totalorder %v2274, 0
        %v2276 = vsel %vm2275, %v2274, 0
        %v2277 = vshrl.u32 %v2276, 5
        %v2278 = vand.u32 %v2276, 31
        %v2279 = vsub.s32 32, %v2278
        %v2280 = vshrl.u32 683565275, %v2279
        %v2281 = vshll.u32 683565275, %v2278
        %v2282 = vshrl.u32 2475754826, %v2279
        %v2283 = vor.u32 %v2281, %v2282
        %v2284 = vshll.u32 2475754826, %v2278
        %v2285 = vshrl.u32 2131351028, %v2279
        %v2286 = vor.u32 %v2284, %v2285
        %v2287 = vshll.u32 2131351028, %v2278
        %v2288 = vshrl.u32 2102212464, %v2279
        %v2289 = vor.u32 %v2287, %v2288
        %v2290 = vshll.u32 2102212464, %v2278
        %v2291 = vshrl.u32 920167782, %v2279
        %v2292 = vor.u32 %v2290, %v2291
        %v2293 = vshll.u32 920167782, %v2278
        %v2294 = vshrl.u32 1326507024, %v2279
        %v2295 = vor.u32 %v2293, %v2294
        %vm2296 = vcmp.lt.s32.totalorder %v2277, 1
        %vm2297 = vcmp.lt.s32.totalorder %v2277, 2
        %vm2298 = vcmp.lt.s32.totalorder %v2277, 3
        %vm2299 = vcmp.lt.s32.totalorder %v2277, 4
        %v2300 = vsel %vm2296, %v2280, %v2283
        %v2301 = vsel %vm2299, %v2289, 2102212464
        %v2302 = vsel %vm2298, %v2286, %v2301
        %v2303 = vsel %vm2297, %v2300, %v2302
        %v2304 = vsel %vm2296, %v2283, %v2286
        %v2305 = vsel %vm2299, %v2292, 920167782
        %v2306 = vsel %vm2298, %v2289, %v2305
        %v2307 = vsel %vm2297, %v2304, %v2306
        %v2308 = vsel %vm2296, %v2286, %v2289
        %v2309 = vsel %vm2299, %v2295, 1326507024
        %v2310 = vsel %vm2298, %v2292, %v2309
        %v2311 = vsel %vm2297, %v2308, %v2310
        %v2312 = vshll.u32 %v2272, 8
        %v2313 = vmul.u32.u64.compose %v2312, %v2311
        %v2314 = vextract.low.u32 %v2313
        %v2315 = vextract.high.u32 %v2313
        %v2316 = vmul.u32.u64.compose %v2312, %v2307
        %v2317 = vextract.low.u32 %v2316
        %v2318 = vextract.high.u32 %v2316
        %v2319 = vmul.u32 %v2312, %v2303
        %v2320 = vadd.s32 %v2315, %v2317
        %vm2321 = vc.u32 %v2315, %v2317
        %v2322 = vadd.s32 %v2318, 1
        %v2323 = vsel %vm2321, %v2322, %v2318
        %v2324 = vadd.s32 %v2319, %v2323
        %v2325 = vadd.s32 %v2324, 536870912
        %v2326 = vshrl.u32 %v2325, 30
        %v2327 = vshll.u32 %v2326, 30
        %v2328 = vsub.s32 %v2324, %v2327
        %vm2329 = vcmp.lt.s32.totalorder %v2328, 0
        %v2330 = vsub.s32 0, %v2328
        %v2331 = vsel %vm2329, %v2330, %v2328
        %v2332 = vclz %v2331
        %v2333 = vsub.s32 %v2332, 2
        %vm2334 = vcmp.gt.s32.totalorder 0, %v2333
        %v2335 = vsel %vm2334, 0, %v2333
        %v2336 = vsub.s32 32, %v2335
        %v2337 = vshll.u32 %v2328, %v2335
        %v2338 = vshrl.u32 %v2320, %v2336
        %v2339 = vor.u32 %v2337, %v2338
        %v2340 = vsub.s32 4294967266, %v2335
        %v2341 = vadd.s32 %v2340, 127
        %v2342 = vshll.u32 %v2341, 23
        %v2343 = vor.u32 4788187, %v2342
        %v2344 = vand.u32 2147483647, %v2343
        %v2346 = vcvt.s32.f32 %v2339
        %v2347 = vmul.f32 %v2346, %v2344
        %v2348 = vxor.u32 %v2347, 2147483648
        %v2349 = vsel %vm2266, %v2348, %v2347
        %v2350 = vsub.s32 4, %v2326
        %v2351 = vsel %vm2266, %v2350, %v2326
        %v2352 = vsel %vm2265, %v2242, %v2349
        %v2353 = vsel %vm2265, 0, %v2351
        %v2354 = vcosq.f32.pop %v2352
        %v2355 = vsinq.f32.pop %v2352
        %vm2356 = vweird.f32 %v2242
        %v2357 = vadd.s32 %v2353, 3
        %v2358 = vand.u32 %v2357, 3
        %vm2359 = vcmp.lt.s32.totalorder %v2358, 2
        %vm2360 = vcmp.eq.s32.totalorder %v2358, 0
        %v2361 = vxor.u32 %v2355, 2147483648
        %v2362 = vsel %vm2360, %v2354, %v2361
        %vm2363 = vcmp.eq.s32.totalorder %v2358, 2
        %v2364 = vxor.u32 %v2354, 2147483648
        %v2365 = vsel %vm2363, %v2364, %v2355
        %v2366 = vsel %vm2359, %v2362, %v2365
        %v2367 = vsel %vm2356, nan, %v2366
        %v2368 = vand.u32 2147483647, %v2244
        %vm2369 = vcmp.le.f32.partialorder %v2368, 0.7853982
        %vm2370 = vcmp.lt.s32.totalorder %v2244, 0
        %v2371 = vand.u32 %v2244, 2139095040
        %v2372 = vshrl.u32 %v2371, 23
        %v2373 = vsub.s32 %v2372, 127
        %v2374 = vand.u32 2147483647, %v2244
        %v2375 = vand.u32 %v2374, 8388607
        %v2376 = vor.u32 %v2375, 8388608
        %v2377 = vsub.s32 0, %v2376
        %v2378 = vadd.s32 %v2373, 1
        %vm2379 = vcmp.gt.s32.totalorder %v2378, 0
        %v2380 = vsel %vm2379, %v2378, 0
        %v2381 = vshrl.u32 %v2380, 5
        %v2382 = vand.u32 %v2380, 31
        %v2383 = vsub.s32 32, %v2382
        %v2384 = vshrl.u32 683565275, %v2383
        %v2385 = vshll.u32 683565275, %v2382
        %v2386 = vshrl.u32 2475754826, %v2383
        %v2387 = vor.u32 %v2385, %v2386
        %v2388 = vshll.u32 2475754826, %v2382
        %v2389 = vshrl.u32 2131351028, %v2383
        %v2390 = vor.u32 %v2388, %v2389
        %v2391 = vshll.u32 2131351028, %v2382
        %v2392 = vshrl.u32 2102212464, %v2383
        %v2393 = vor.u32 %v2391, %v2392
        %v2394 = vshll.u32 2102212464, %v2382
        %v2395 = vshrl.u32 920167782, %v2383
        %v2396 = vor.u32 %v2394, %v2395
        %v2397 = vshll.u32 920167782, %v2382
        %v2398 = vshrl.u32 1326507024, %v2383
        %v2399 = vor.u32 %v2397, %v2398
        %vm2400 = vcmp.lt.s32.totalorder %v2381, 1
        %vm2401 = vcmp.lt.s32.totalorder %v2381, 2
        %vm2402 = vcmp.lt.s32.totalorder %v2381, 3
        %vm2403 = vcmp.lt.s32.totalorder %v2381, 4
        %v2404 = vsel %vm2400, %v2384, %v2387
        %v2405 = vsel %vm2403, %v2393, 2102212464
        %v2406 = vsel %vm2402, %v2390, %v2405
        %v2407 = vsel %vm2401, %v2404, %v2406
        %v2408 = vsel %vm2400, %v2387, %v2390
        %v2409 = vsel %vm2403, %v2396, 920167782
        %v2410 = vsel %vm2402, %v2393, %v2409
        %v2411 = vsel %vm2401, %v2408, %v2410
        %v2412 = vsel %vm2400, %v2390, %v2393
        %v2413 = vsel %vm2403, %v2399, 1326507024
        %v2414 = vsel %vm2402, %v2396, %v2413
        %v2415 = vsel %vm2401, %v2412, %v2414
        %v2416 = vshll.u32 %v2376, 8
        %v2417 = vmul.u32.u64.compose %v2416, %v2415
        %v2418 = vextract.low.u32 %v2417
        %v2419 = vextract.high.u32 %v2417
        %v2420 = vmul.u32.u64.compose %v2416, %v2411
        %v2421 = vextract.low.u32 %v2420
        %v2422 = vextract.high.u32 %v2420
        %v2423 = vmul.u32 %v2416, %v2407
        %v2424 = vadd.s32 %v2419, %v2421
        %vm2425 = vc.u32 %v2419, %v2421
        %v2426 = vadd.s32 %v2422, 1
        %v2427 = vsel %vm2425, %v2426, %v2422
        %v2428 = vadd.s32 %v2423, %v2427
        %v2429 = vadd.s32 %v2428, 536870912
        %v2430 = vshrl.u32 %v2429, 30
        %v2431 = vshll.u32 %v2430, 30
        %v2432 = vsub.s32 %v2428, %v2431
        %vm2433 = vcmp.lt.s32.totalorder %v2432, 0
        %v2434 = vsub.s32 0, %v2432
        %v2435 = vsel %vm2433, %v2434, %v2432
        %v2436 = vclz %v2435
        %v2437 = vsub.s32 %v2436, 2
        %vm2438 = vcmp.gt.s32.totalorder 0, %v2437
        %v2439 = vsel %vm2438, 0, %v2437
        %v2440 = vsub.s32 32, %v2439
        %v2441 = vshll.u32 %v2432, %v2439
        %v2442 = vshrl.u32 %v2424, %v2440
        %v2443 = vor.u32 %v2441, %v2442
        %v2444 = vsub.s32 4294967266, %v2439
        %v2445 = vadd.s32 %v2444, 127
        %v2446 = vshll.u32 %v2445, 23
        %v2447 = vor.u32 4788187, %v2446
        %v2448 = vand.u32 2147483647, %v2447
        %v2450 = vcvt.s32.f32 %v2443
        %v2451 = vmul.f32 %v2450, %v2448
        %v2452 = vxor.u32 %v2451, 2147483648
        %v2453 = vsel %vm2370, %v2452, %v2451
        %v2454 = vsub.s32 4, %v2430
        %v2455 = vsel %vm2370, %v2454, %v2430
        %v2456 = vsel %vm2369, %v2244, %v2453
        %v2457 = vsel %vm2369, 0, %v2455
        %v2458 = vcosq.f32.pop %v2456
        %v2459 = vsinq.f32.pop %v2456
        %vm2460 = vweird.f32 %v2244
        %v2461 = vadd.s32 %v2457, 3
        %v2462 = vand.u32 %v2461, 3
        %vm2463 = vcmp.lt.s32.totalorder %v2462, 2
        %vm2464 = vcmp.eq.s32.totalorder %v2462, 0
        %v2465 = vxor.u32 %v2459, 2147483648
        %v2466 = vsel %vm2464, %v2458, %v2465
        %vm2467 = vcmp.eq.s32.totalorder %v2462, 2
        %v2468 = vxor.u32 %v2458, 2147483648
        %v2469 = vsel %vm2467, %v2468, %v2459
        %v2470 = vsel %vm2463, %v2466, %v2469
        %v2471 = vsel %vm2460, nan, %v2470
        %v2472 = vand.u32 2147483647, %v2248
        %vm2473 = vcmp.le.f32.partialorder %v2472, 0.7853982
        %vm2474 = vcmp.lt.s32.totalorder %v2248, 0
        %v2475 = vand.u32 %v2248, 2139095040
        %v2476 = vshrl.u32 %v2475, 23
        %v2477 = vsub.s32 %v2476, 127
        %v2478 = vand.u32 2147483647, %v2248
        %v2479 = vand.u32 %v2478, 8388607
        %v2480 = vor.u32 %v2479, 8388608
        %v2481 = vsub.s32 0, %v2480
        %v2482 = vadd.s32 %v2477, 1
        %vm2483 = vcmp.gt.s32.totalorder %v2482, 0
        %v2484 = vsel %vm2483, %v2482, 0
        %v2485 = vshrl.u32 %v2484, 5
        %v2486 = vand.u32 %v2484, 31
        %v2487 = vsub.s32 32, %v2486
        %v2488 = vshrl.u32 683565275, %v2487
        %v2489 = vshll.u32 683565275, %v2486
        %v2490 = vshrl.u32 2475754826, %v2487
        %v2491 = vor.u32 %v2489, %v2490
        %v2492 = vshll.u32 2475754826, %v2486
        %v2493 = vshrl.u32 2131351028, %v2487
        %v2494 = vor.u32 %v2492, %v2493
        %v2495 = vshll.u32 2131351028, %v2486
        %v2496 = vshrl.u32 2102212464, %v2487
        %v2497 = vor.u32 %v2495, %v2496
        %v2498 = vshll.u32 2102212464, %v2486
        %v2499 = vshrl.u32 920167782, %v2487
        %v2500 = vor.u32 %v2498, %v2499
        %v2501 = vshll.u32 920167782, %v2486
        %v2502 = vshrl.u32 1326507024, %v2487
        %v2503 = vor.u32 %v2501, %v2502
        %vm2504 = vcmp.lt.s32.totalorder %v2485, 1
        %vm2505 = vcmp.lt.s32.totalorder %v2485, 2
        %vm2506 = vcmp.lt.s32.totalorder %v2485, 3
        %vm2507 = vcmp.lt.s32.totalorder %v2485, 4
        %v2508 = vsel %vm2504, %v2488, %v2491
        %v2509 = vsel %vm2507, %v2497, 2102212464
        %v2510 = vsel %vm2506, %v2494, %v2509
        %v2511 = vsel %vm2505, %v2508, %v2510
        %v2512 = vsel %vm2504, %v2491, %v2494
        %v2513 = vsel %vm2507, %v2500, 920167782
        %v2514 = vsel %vm2506, %v2497, %v2513
        %v2515 = vsel %vm2505, %v2512, %v2514
        %v2516 = vsel %vm2504, %v2494, %v2497
        %v2517 = vsel %vm2507, %v2503, 1326507024
        %v2518 = vsel %vm2506, %v2500, %v2517
        %v2519 = vsel %vm2505, %v2516, %v2518
        %v2520 = vshll.u32 %v2480, 8
        %v2521 = vmul.u32.u64.compose %v2520, %v2519
        %v2522 = vextract.low.u32 %v2521
        %v2523 = vextract.high.u32 %v2521
        %v2524 = vmul.u32.u64.compose %v2520, %v2515
        %v2525 = vextract.low.u32 %v2524
        %v2526 = vextract.high.u32 %v2524
        %v2527 = vmul.u32 %v2520, %v2511
        %v2528 = vadd.s32 %v2523, %v2525
        %vm2529 = vc.u32 %v2523, %v2525
        %v2530 = vadd.s32 %v2526, 1
        %v2531 = vsel %vm2529, %v2530, %v2526
        %v2532 = vadd.s32 %v2527, %v2531
        %v2533 = vadd.s32 %v2532, 536870912
        %v2534 = vshrl.u32 %v2533, 30
        %v2535 = vshll.u32 %v2534, 30
        %v2536 = vsub.s32 %v2532, %v2535
        %vm2537 = vcmp.lt.s32.totalorder %v2536, 0
        %v2538 = vsub.s32 0, %v2536
        %v2539 = vsel %vm2537, %v2538, %v2536
        %v2540 = vclz %v2539
        %v2541 = vsub.s32 %v2540, 2
        %vm2542 = vcmp.gt.s32.totalorder 0, %v2541
        %v2543 = vsel %vm2542, 0, %v2541
        %v2544 = vsub.s32 32, %v2543
        %v2545 = vshll.u32 %v2536, %v2543
        %v2546 = vshrl.u32 %v2528, %v2544
        %v2547 = vor.u32 %v2545, %v2546
        %v2548 = vsub.s32 4294967266, %v2543
        %v2549 = vadd.s32 %v2548, 127
        %v2550 = vshll.u32 %v2549, 23
        %v2551 = vor.u32 4788187, %v2550
        %v2552 = vand.u32 2147483647, %v2551
        %v2554 = vcvt.s32.f32 %v2547
        %v2555 = vmul.f32 %v2554, %v2552
        %v2556 = vxor.u32 %v2555, 2147483648
        %v2557 = vsel %vm2474, %v2556, %v2555
        %v2558 = vsub.s32 4, %v2534
        %v2559 = vsel %vm2474, %v2558, %v2534
        %v2560 = vsel %vm2473, %v2248, %v2557
        %v2561 = vsel %vm2473, 0, %v2559
        %v2562 = vcosq.f32.pop %v2560
        %v2563 = vsinq.f32.pop %v2560
        %vm2564 = vweird.f32 %v2248
        %v2565 = vadd.s32 %v2561, 3
        %v2566 = vand.u32 %v2565, 3
        %vm2567 = vcmp.lt.s32.totalorder %v2566, 2
        %vm2568 = vcmp.eq.s32.totalorder %v2566, 0
        %v2569 = vxor.u32 %v2563, 2147483648
        %v2570 = vsel %vm2568, %v2562, %v2569
        %vm2571 = vcmp.eq.s32.totalorder %v2566, 2
        %v2572 = vxor.u32 %v2562, 2147483648
        %v2573 = vsel %vm2571, %v2572, %v2563
        %v2574 = vsel %vm2567, %v2570, %v2573
        %v2575 = vsel %vm2564, nan, %v2574
        %v2576 = vand.u32 2147483647, %v2250
        %vm2577 = vcmp.le.f32.partialorder %v2576, 0.7853982
        %vm2578 = vcmp.lt.s32.totalorder %v2250, 0
        %v2579 = vand.u32 %v2250, 2139095040
        %v2580 = vshrl.u32 %v2579, 23
        %v2581 = vsub.s32 %v2580, 127
        %v2582 = vand.u32 2147483647, %v2250
        %v2583 = vand.u32 %v2582, 8388607
        %v2584 = vor.u32 %v2583, 8388608
        %v2585 = vsub.s32 0, %v2584
        %v2586 = vadd.s32 %v2581, 1
        %vm2587 = vcmp.gt.s32.totalorder %v2586, 0
        %v2588 = vsel %vm2587, %v2586, 0
        %v2589 = vshrl.u32 %v2588, 5
        %v2590 = vand.u32 %v2588, 31
        %v2591 = vsub.s32 32, %v2590
        %v2592 = vshrl.u32 683565275, %v2591
        %v2593 = vshll.u32 683565275, %v2590
        %v2594 = vshrl.u32 2475754826, %v2591
        %v2595 = vor.u32 %v2593, %v2594
        %v2596 = vshll.u32 2475754826, %v2590
        %v2597 = vshrl.u32 2131351028, %v2591
        %v2598 = vor.u32 %v2596, %v2597
        %v2599 = vshll.u32 2131351028, %v2590
        %v2600 = vshrl.u32 2102212464, %v2591
        %v2601 = vor.u32 %v2599, %v2600
        %v2602 = vshll.u32 2102212464, %v2590
        %v2603 = vshrl.u32 920167782, %v2591
        %v2604 = vor.u32 %v2602, %v2603
        %v2605 = vshll.u32 920167782, %v2590
        %v2606 = vshrl.u32 1326507024, %v2591
        %v2607 = vor.u32 %v2605, %v2606
        %vm2608 = vcmp.lt.s32.totalorder %v2589, 1
        %vm2609 = vcmp.lt.s32.totalorder %v2589, 2
        %vm2610 = vcmp.lt.s32.totalorder %v2589, 3
        %vm2611 = vcmp.lt.s32.totalorder %v2589, 4
        %v2612 = vsel %vm2608, %v2592, %v2595
        %v2613 = vsel %vm2611, %v2601, 2102212464
        %v2614 = vsel %vm2610, %v2598, %v2613
        %v2615 = vsel %vm2609, %v2612, %v2614
        %v2616 = vsel %vm2608, %v2595, %v2598
        %v2617 = vsel %vm2611, %v2604, 920167782
        %v2618 = vsel %vm2610, %v2601, %v2617
        %v2619 = vsel %vm2609, %v2616, %v2618
        %v2620 = vsel %vm2608, %v2598, %v2601
        %v2621 = vsel %vm2611, %v2607, 1326507024
        %v2622 = vsel %vm2610, %v2604, %v2621
        %v2623 = vsel %vm2609, %v2620, %v2622
        %v2624 = vshll.u32 %v2584, 8
        %v2625 = vmul.u32.u64.compose %v2624, %v2623
        %v2626 = vextract.low.u32 %v2625
        %v2627 = vextract.high.u32 %v2625
        %v2628 = vmul.u32.u64.compose %v2624, %v2619
        %v2629 = vextract.low.u32 %v2628
        %v2630 = vextract.high.u32 %v2628
        %v2631 = vmul.u32 %v2624, %v2615
        %v2632 = vadd.s32 %v2627, %v2629
        %vm2633 = vc.u32 %v2627, %v2629
        %v2634 = vadd.s32 %v2630, 1
        %v2635 = vsel %vm2633, %v2634, %v2630
        %v2636 = vadd.s32 %v2631, %v2635
        %v2637 = vadd.s32 %v2636, 536870912
        %v2638 = vshrl.u32 %v2637, 30
        %v2639 = vshll.u32 %v2638, 30
        %v2640 = vsub.s32 %v2636, %v2639
        %vm2641 = vcmp.lt.s32.totalorder %v2640, 0
        %v2642 = vsub.s32 0, %v2640
        %v2643 = vsel %vm2641, %v2642, %v2640
        %v2644 = vclz %v2643
        %v2645 = vsub.s32 %v2644, 2
        %vm2646 = vcmp.gt.s32.totalorder 0, %v2645
        %v2647 = vsel %vm2646, 0, %v2645
        %v2648 = vsub.s32 32, %v2647
        %v2649 = vshll.u32 %v2640, %v2647
        %v2650 = vshrl.u32 %v2632, %v2648
        %v2651 = vor.u32 %v2649, %v2650
        %v2652 = vsub.s32 4294967266, %v2647
        %v2653 = vadd.s32 %v2652, 127
        %v2654 = vshll.u32 %v2653, 23
        %v2655 = vor.u32 4788187, %v2654
        %v2656 = vand.u32 2147483647, %v2655
        %v2658 = vcvt.s32.f32 %v2651
        %v2659 = vmul.f32 %v2658, %v2656
        %v2660 = vxor.u32 %v2659, 2147483648
        %v2661 = vsel %vm2578, %v2660, %v2659
        %v2662 = vsub.s32 4, %v2638
        %v2663 = vsel %vm2578, %v2662, %v2638
        %v2664 = vsel %vm2577, %v2250, %v2661
        %v2665 = vsel %vm2577, 0, %v2663
        %v2666 = vcosq.f32.pop %v2664
        %v2667 = vsinq.f32.pop %v2664
        %vm2668 = vweird.f32 %v2250
        %v2669 = vadd.s32 %v2665, 3
        %v2670 = vand.u32 %v2669, 3
        %vm2671 = vcmp.lt.s32.totalorder %v2670, 2
        %vm2672 = vcmp.eq.s32.totalorder %v2670, 0
        %v2673 = vxor.u32 %v2667, 2147483648
        %v2674 = vsel %vm2672, %v2666, %v2673
        %vm2675 = vcmp.eq.s32.totalorder %v2670, 2
        %v2676 = vxor.u32 %v2666, 2147483648
        %v2677 = vsel %vm2675, %v2676, %v2667
        %v2678 = vsel %vm2671, %v2674, %v2677
        %v2679 = vsel %vm2668, nan, %v2678
        %v2680 = vand.u32 2147483647, %v2254
        %vm2681 = vcmp.le.f32.partialorder %v2680, 0.7853982
        %vm2682 = vcmp.lt.s32.totalorder %v2254, 0
        %v2683 = vand.u32 %v2254, 2139095040
        %v2684 = vshrl.u32 %v2683, 23
        %v2685 = vsub.s32 %v2684, 127
        %v2686 = vand.u32 2147483647, %v2254
        %v2687 = vand.u32 %v2686, 8388607
        %v2688 = vor.u32 %v2687, 8388608
        %v2689 = vsub.s32 0, %v2688
        %v2690 = vadd.s32 %v2685, 1
        %vm2691 = vcmp.gt.s32.totalorder %v2690, 0
        %v2692 = vsel %vm2691, %v2690, 0
        %v2693 = vshrl.u32 %v2692, 5
        %v2694 = vand.u32 %v2692, 31
        %v2695 = vsub.s32 32, %v2694
        %v2696 = vshrl.u32 683565275, %v2695
        %v2697 = vshll.u32 683565275, %v2694
        %v2698 = vshrl.u32 2475754826, %v2695
        %v2699 = vor.u32 %v2697, %v2698
        %v2700 = vshll.u32 2475754826, %v2694
        %v2701 = vshrl.u32 2131351028, %v2695
        %v2702 = vor.u32 %v2700, %v2701
        %v2703 = vshll.u32 2131351028, %v2694
        %v2704 = vshrl.u32 2102212464, %v2695
        %v2705 = vor.u32 %v2703, %v2704
        %v2706 = vshll.u32 2102212464, %v2694
        %v2707 = vshrl.u32 920167782, %v2695
        %v2708 = vor.u32 %v2706, %v2707
        %v2709 = vshll.u32 920167782, %v2694
        %v2710 = vshrl.u32 1326507024, %v2695
        %v2711 = vor.u32 %v2709, %v2710
        %vm2712 = vcmp.lt.s32.totalorder %v2693, 1
        %vm2713 = vcmp.lt.s32.totalorder %v2693, 2
        %vm2714 = vcmp.lt.s32.totalorder %v2693, 3
        %vm2715 = vcmp.lt.s32.totalorder %v2693, 4
        %v2716 = vsel %vm2712, %v2696, %v2699
        %v2717 = vsel %vm2715, %v2705, 2102212464
        %v2718 = vsel %vm2714, %v2702, %v2717
        %v2719 = vsel %vm2713, %v2716, %v2718
        %v2720 = vsel %vm2712, %v2699, %v2702
        %v2721 = vsel %vm2715, %v2708, 920167782
        %v2722 = vsel %vm2714, %v2705, %v2721
        %v2723 = vsel %vm2713, %v2720, %v2722
        %v2724 = vsel %vm2712, %v2702, %v2705
        %v2725 = vsel %vm2715, %v2711, 1326507024
        %v2726 = vsel %vm2714, %v2708, %v2725
        %v2727 = vsel %vm2713, %v2724, %v2726
        %v2728 = vshll.u32 %v2688, 8
        %v2729 = vmul.u32.u64.compose %v2728, %v2727
        %v2730 = vextract.low.u32 %v2729
        %v2731 = vextract.high.u32 %v2729
        %v2732 = vmul.u32.u64.compose %v2728, %v2723
        %v2733 = vextract.low.u32 %v2732
        %v2734 = vextract.high.u32 %v2732
        %v2735 = vmul.u32 %v2728, %v2719
        %v2736 = vadd.s32 %v2731, %v2733
        %vm2737 = vc.u32 %v2731, %v2733
        %v2738 = vadd.s32 %v2734, 1
        %v2739 = vsel %vm2737, %v2738, %v2734
        %v2740 = vadd.s32 %v2735, %v2739
        %v2741 = vadd.s32 %v2740, 536870912
        %v2742 = vshrl.u32 %v2741, 30
        %v2743 = vshll.u32 %v2742, 30
        %v2744 = vsub.s32 %v2740, %v2743
        %vm2745 = vcmp.lt.s32.totalorder %v2744, 0
        %v2746 = vsub.s32 0, %v2744
        %v2747 = vsel %vm2745, %v2746, %v2744
        %v2748 = vclz %v2747
        %v2749 = vsub.s32 %v2748, 2
        %vm2750 = vcmp.gt.s32.totalorder 0, %v2749
        %v2751 = vsel %vm2750, 0, %v2749
        %v2752 = vsub.s32 32, %v2751
        %v2753 = vshll.u32 %v2744, %v2751
        %v2754 = vshrl.u32 %v2736, %v2752
        %v2755 = vor.u32 %v2753, %v2754
        %v2756 = vsub.s32 4294967266, %v2751
        %v2757 = vadd.s32 %v2756, 127
        %v2758 = vshll.u32 %v2757, 23
        %v2759 = vor.u32 4788187, %v2758
        %v2760 = vand.u32 2147483647, %v2759
        %v2762 = vcvt.s32.f32 %v2755
        %v2763 = vmul.f32 %v2762, %v2760
        %v2764 = vxor.u32 %v2763, 2147483648
        %v2765 = vsel %vm2682, %v2764, %v2763
        %v2766 = vsub.s32 4, %v2742
        %v2767 = vsel %vm2682, %v2766, %v2742
        %v2768 = vsel %vm2681, %v2254, %v2765
        %v2769 = vsel %vm2681, 0, %v2767
        %v2770 = vcosq.f32.pop %v2768
        %v2771 = vsinq.f32.pop %v2768
        %vm2772 = vweird.f32 %v2254
        %v2773 = vadd.s32 %v2769, 3
        %v2774 = vand.u32 %v2773, 3
        %vm2775 = vcmp.lt.s32.totalorder %v2774, 2
        %vm2776 = vcmp.eq.s32.totalorder %v2774, 0
        %v2777 = vxor.u32 %v2771, 2147483648
        %v2778 = vsel %vm2776, %v2770, %v2777
        %vm2779 = vcmp.eq.s32.totalorder %v2774, 2
        %v2780 = vxor.u32 %v2770, 2147483648
        %v2781 = vsel %vm2779, %v2780, %v2771
        %v2782 = vsel %vm2775, %v2778, %v2781
        %v2783 = vsel %vm2772, nan, %v2782
        %v2784 = vand.u32 2147483647, %v2256
        %vm2785 = vcmp.le.f32.partialorder %v2784, 0.7853982
        %vm2786 = vcmp.lt.s32.totalorder %v2256, 0
        %v2787 = vand.u32 %v2256, 2139095040
        %v2788 = vshrl.u32 %v2787, 23
        %v2789 = vsub.s32 %v2788, 127
        %v2790 = vand.u32 2147483647, %v2256
        %v2791 = vand.u32 %v2790, 8388607
        %v2792 = vor.u32 %v2791, 8388608
        %v2793 = vsub.s32 0, %v2792
        %v2794 = vadd.s32 %v2789, 1
        %vm2795 = vcmp.gt.s32.totalorder %v2794, 0
        %v2796 = vsel %vm2795, %v2794, 0
        %v2797 = vshrl.u32 %v2796, 5
        %v2798 = vand.u32 %v2796, 31
        %v2799 = vsub.s32 32, %v2798
        %v2800 = vshrl.u32 683565275, %v2799
        %v2801 = vshll.u32 683565275, %v2798
        %v2802 = vshrl.u32 2475754826, %v2799
        %v2803 = vor.u32 %v2801, %v2802
        %v2804 = vshll.u32 2475754826, %v2798
        %v2805 = vshrl.u32 2131351028, %v2799
        %v2806 = vor.u32 %v2804, %v2805
        %v2807 = vshll.u32 2131351028, %v2798
        %v2808 = vshrl.u32 2102212464, %v2799
        %v2809 = vor.u32 %v2807, %v2808
        %v2810 = vshll.u32 2102212464, %v2798
        %v2811 = vshrl.u32 920167782, %v2799
        %v2812 = vor.u32 %v2810, %v2811
        %v2813 = vshll.u32 920167782, %v2798
        %v2814 = vshrl.u32 1326507024, %v2799
        %v2815 = vor.u32 %v2813, %v2814
        %vm2816 = vcmp.lt.s32.totalorder %v2797, 1
        %vm2817 = vcmp.lt.s32.totalorder %v2797, 2
        %vm2818 = vcmp.lt.s32.totalorder %v2797, 3
        %vm2819 = vcmp.lt.s32.totalorder %v2797, 4
        %v2820 = vsel %vm2816, %v2800, %v2803
        %v2821 = vsel %vm2819, %v2809, 2102212464
        %v2822 = vsel %vm2818, %v2806, %v2821
        %v2823 = vsel %vm2817, %v2820, %v2822
        %v2824 = vsel %vm2816, %v2803, %v2806
        %v2825 = vsel %vm2819, %v2812, 920167782
        %v2826 = vsel %vm2818, %v2809, %v2825
        %v2827 = vsel %vm2817, %v2824, %v2826
        %v2828 = vsel %vm2816, %v2806, %v2809
        %v2829 = vsel %vm2819, %v2815, 1326507024
        %v2830 = vsel %vm2818, %v2812, %v2829
        %v2831 = vsel %vm2817, %v2828, %v2830
        %v2832 = vshll.u32 %v2792, 8
        %v2833 = vmul.u32.u64.compose %v2832, %v2831
        %v2834 = vextract.low.u32 %v2833
        %v2835 = vextract.high.u32 %v2833
        %v2836 = vmul.u32.u64.compose %v2832, %v2827
        %v2837 = vextract.low.u32 %v2836
        %v2838 = vextract.high.u32 %v2836
        %v2839 = vmul.u32 %v2832, %v2823
        %v2840 = vadd.s32 %v2835, %v2837
        %vm2841 = vc.u32 %v2835, %v2837
        %v2842 = vadd.s32 %v2838, 1
        %v2843 = vsel %vm2841, %v2842, %v2838
        %v2844 = vadd.s32 %v2839, %v2843
        %v2845 = vadd.s32 %v2844, 536870912
        %v2846 = vshrl.u32 %v2845, 30
        %v2847 = vshll.u32 %v2846, 30
        %v2848 = vsub.s32 %v2844, %v2847
        %vm2849 = vcmp.lt.s32.totalorder %v2848, 0
        %v2850 = vsub.s32 0, %v2848
        %v2851 = vsel %vm2849, %v2850, %v2848
        %v2852 = vclz %v2851
        %v2853 = vsub.s32 %v2852, 2
        %vm2854 = vcmp.gt.s32.totalorder 0, %v2853
        %v2855 = vsel %vm2854, 0, %v2853
        %v2856 = vsub.s32 32, %v2855
        %v2857 = vshll.u32 %v2848, %v2855
        %v2858 = vshrl.u32 %v2840, %v2856
        %v2859 = vor.u32 %v2857, %v2858
        %v2860 = vsub.s32 4294967266, %v2855
        %v2861 = vadd.s32 %v2860, 127
        %v2862 = vshll.u32 %v2861, 23
        %v2863 = vor.u32 4788187, %v2862
        %v2864 = vand.u32 2147483647, %v2863
        %v2866 = vcvt.s32.f32 %v2859
        %v2867 = vmul.f32 %v2866, %v2864
        %v2868 = vxor.u32 %v2867, 2147483648
        %v2869 = vsel %vm2786, %v2868, %v2867
        %v2870 = vsub.s32 4, %v2846
        %v2871 = vsel %vm2786, %v2870, %v2846
        %v2872 = vsel %vm2785, %v2256, %v2869
        %v2873 = vsel %vm2785, 0, %v2871
        %v2874 = vcosq.f32.pop %v2872
        %v2875 = vsinq.f32.pop %v2872
        %vm2876 = vweird.f32 %v2256
        %v2877 = vadd.s32 %v2873, 3
        %v2878 = vand.u32 %v2877, 3
        %vm2879 = vcmp.lt.s32.totalorder %v2878, 2
        %vm2880 = vcmp.eq.s32.totalorder %v2878, 0
        %v2881 = vxor.u32 %v2875, 2147483648
        %v2882 = vsel %vm2880, %v2874, %v2881
        %vm2883 = vcmp.eq.s32.totalorder %v2878, 2
        %v2884 = vxor.u32 %v2874, 2147483648
        %v2885 = vsel %vm2883, %v2884, %v2875
        %v2886 = vsel %vm2879, %v2882, %v2885
        %v2887 = vsel %vm2876, nan, %v2886
        %v2888 = vand.u32 2147483647, %v2260
        %vm2889 = vcmp.le.f32.partialorder %v2888, 0.7853982
        %vm2890 = vcmp.lt.s32.totalorder %v2260, 0
        %v2891 = vand.u32 %v2260, 2139095040
        %v2892 = vshrl.u32 %v2891, 23
        %v2893 = vsub.s32 %v2892, 127
        %v2894 = vand.u32 2147483647, %v2260
        %v2895 = vand.u32 %v2894, 8388607
        %v2896 = vor.u32 %v2895, 8388608
        %v2897 = vsub.s32 0, %v2896
        %v2898 = vadd.s32 %v2893, 1
        %vm2899 = vcmp.gt.s32.totalorder %v2898, 0
        %v2900 = vsel %vm2899, %v2898, 0
        %v2901 = vshrl.u32 %v2900, 5
        %v2902 = vand.u32 %v2900, 31
        %v2903 = vsub.s32 32, %v2902
        %v2904 = vshrl.u32 683565275, %v2903
        %v2905 = vshll.u32 683565275, %v2902
        %v2906 = vshrl.u32 2475754826, %v2903
        %v2907 = vor.u32 %v2905, %v2906
        %v2908 = vshll.u32 2475754826, %v2902
        %v2909 = vshrl.u32 2131351028, %v2903
        %v2910 = vor.u32 %v2908, %v2909
        %v2911 = vshll.u32 2131351028, %v2902
        %v2912 = vshrl.u32 2102212464, %v2903
        %v2913 = vor.u32 %v2911, %v2912
        %v2914 = vshll.u32 2102212464, %v2902
        %v2915 = vshrl.u32 920167782, %v2903
        %v2916 = vor.u32 %v2914, %v2915
        %v2917 = vshll.u32 920167782, %v2902
        %v2918 = vshrl.u32 1326507024, %v2903
        %v2919 = vor.u32 %v2917, %v2918
        %vm2920 = vcmp.lt.s32.totalorder %v2901, 1
        %vm2921 = vcmp.lt.s32.totalorder %v2901, 2
        %vm2922 = vcmp.lt.s32.totalorder %v2901, 3
        %vm2923 = vcmp.lt.s32.totalorder %v2901, 4
        %v2924 = vsel %vm2920, %v2904, %v2907
        %v2925 = vsel %vm2923, %v2913, 2102212464
        %v2926 = vsel %vm2922, %v2910, %v2925
        %v2927 = vsel %vm2921, %v2924, %v2926
        %v2928 = vsel %vm2920, %v2907, %v2910
        %v2929 = vsel %vm2923, %v2916, 920167782
        %v2930 = vsel %vm2922, %v2913, %v2929
        %v2931 = vsel %vm2921, %v2928, %v2930
        %v2932 = vsel %vm2920, %v2910, %v2913
        %v2933 = vsel %vm2923, %v2919, 1326507024
        %v2934 = vsel %vm2922, %v2916, %v2933
        %v2935 = vsel %vm2921, %v2932, %v2934
        %v2936 = vshll.u32 %v2896, 8
        %v2937 = vmul.u32.u64.compose %v2936, %v2935
        %v2938 = vextract.low.u32 %v2937
        %v2939 = vextract.high.u32 %v2937
        %v2940 = vmul.u32.u64.compose %v2936, %v2931
        %v2941 = vextract.low.u32 %v2940
        %v2942 = vextract.high.u32 %v2940
        %v2943 = vmul.u32 %v2936, %v2927
        %v2944 = vadd.s32 %v2939, %v2941
        %vm2945 = vc.u32 %v2939, %v2941
        %v2946 = vadd.s32 %v2942, 1
        %v2947 = vsel %vm2945, %v2946, %v2942
        %v2948 = vadd.s32 %v2943, %v2947
        %v2949 = vadd.s32 %v2948, 536870912
        %v2950 = vshrl.u32 %v2949, 30
        %v2951 = vshll.u32 %v2950, 30
        %v2952 = vsub.s32 %v2948, %v2951
        %vm2953 = vcmp.lt.s32.totalorder %v2952, 0
        %v2954 = vsub.s32 0, %v2952
        %v2955 = vsel %vm2953, %v2954, %v2952
        %v2956 = vclz %v2955
        %v2957 = vsub.s32 %v2956, 2
        %vm2958 = vcmp.gt.s32.totalorder 0, %v2957
        %v2959 = vsel %vm2958, 0, %v2957
        %v2960 = vsub.s32 32, %v2959
        %v2961 = vshll.u32 %v2952, %v2959
        %v2962 = vshrl.u32 %v2944, %v2960
        %v2963 = vor.u32 %v2961, %v2962
        %v2964 = vsub.s32 4294967266, %v2959
        %v2965 = vadd.s32 %v2964, 127
        %v2966 = vshll.u32 %v2965, 23
        %v2967 = vor.u32 4788187, %v2966
        %v2968 = vand.u32 2147483647, %v2967
        %v2970 = vcvt.s32.f32 %v2963
        %v2971 = vmul.f32 %v2970, %v2968
        %v2972 = vxor.u32 %v2971, 2147483648
        %v2973 = vsel %vm2890, %v2972, %v2971
        %v2974 = vsub.s32 4, %v2950
        %v2975 = vsel %vm2890, %v2974, %v2950
        %v2976 = vsel %vm2889, %v2260, %v2973
        %v2977 = vsel %vm2889, 0, %v2975
        %v2978 = vcosq.f32.pop %v2976
        %v2979 = vsinq.f32.pop %v2976
        %vm2980 = vweird.f32 %v2260
        %v2981 = vadd.s32 %v2977, 3
        %v2982 = vand.u32 %v2981, 3
        %vm2983 = vcmp.lt.s32.totalorder %v2982, 2
        %vm2984 = vcmp.eq.s32.totalorder %v2982, 0
        %v2985 = vxor.u32 %v2979, 2147483648
        %v2986 = vsel %vm2984, %v2978, %v2985
        %vm2987 = vcmp.eq.s32.totalorder %v2982, 2
        %v2988 = vxor.u32 %v2978, 2147483648
        %v2989 = vsel %vm2987, %v2988, %v2979
        %v2990 = vsel %vm2983, %v2986, %v2989
        %v2991 = vsel %vm2980, nan, %v2990
        %v2992 = vand.u32 2147483647, %v2262
        %vm2993 = vcmp.le.f32.partialorder %v2992, 0.7853982
        %vm2994 = vcmp.lt.s32.totalorder %v2262, 0
        %v2995 = vand.u32 %v2262, 2139095040
        %v2996 = vshrl.u32 %v2995, 23
        %v2997 = vsub.s32 %v2996, 127
        %v2998 = vand.u32 2147483647, %v2262
        %v2999 = vand.u32 %v2998, 8388607
        %v3000 = vor.u32 %v2999, 8388608
        %v3001 = vsub.s32 0, %v3000
        %v3002 = vadd.s32 %v2997, 1
        %vm3003 = vcmp.gt.s32.totalorder %v3002, 0
        %v3004 = vsel %vm3003, %v3002, 0
        %v3005 = vshrl.u32 %v3004, 5
        %v3006 = vand.u32 %v3004, 31
        %v3007 = vsub.s32 32, %v3006
        %v3008 = vshrl.u32 683565275, %v3007
        %v3009 = vshll.u32 683565275, %v3006
        %v3010 = vshrl.u32 2475754826, %v3007
        %v3011 = vor.u32 %v3009, %v3010
        %v3012 = vshll.u32 2475754826, %v3006
        %v3013 = vshrl.u32 2131351028, %v3007
        %v3014 = vor.u32 %v3012, %v3013
        %v3015 = vshll.u32 2131351028, %v3006
        %v3016 = vshrl.u32 2102212464, %v3007
        %v3017 = vor.u32 %v3015, %v3016
        %v3018 = vshll.u32 2102212464, %v3006
        %v3019 = vshrl.u32 920167782, %v3007
        %v3020 = vor.u32 %v3018, %v3019
        %v3021 = vshll.u32 920167782, %v3006
        %v3022 = vshrl.u32 1326507024, %v3007
        %v3023 = vor.u32 %v3021, %v3022
        %vm3024 = vcmp.lt.s32.totalorder %v3005, 1
        %vm3025 = vcmp.lt.s32.totalorder %v3005, 2
        %vm3026 = vcmp.lt.s32.totalorder %v3005, 3
        %vm3027 = vcmp.lt.s32.totalorder %v3005, 4
        %v3028 = vsel %vm3024, %v3008, %v3011
        %v3029 = vsel %vm3027, %v3017, 2102212464
        %v3030 = vsel %vm3026, %v3014, %v3029
        %v3031 = vsel %vm3025, %v3028, %v3030
        %v3032 = vsel %vm3024, %v3011, %v3014
        %v3033 = vsel %vm3027, %v3020, 920167782
        %v3034 = vsel %vm3026, %v3017, %v3033
        %v3035 = vsel %vm3025, %v3032, %v3034
        %v3036 = vsel %vm3024, %v3014, %v3017
        %v3037 = vsel %vm3027, %v3023, 1326507024
        %v3038 = vsel %vm3026, %v3020, %v3037
        %v3039 = vsel %vm3025, %v3036, %v3038
        %v3040 = vshll.u32 %v3000, 8
        %v3041 = vmul.u32.u64.compose %v3040, %v3039
        %v3042 = vextract.low.u32 %v3041
        %v3043 = vextract.high.u32 %v3041
        %v3044 = vmul.u32.u64.compose %v3040, %v3035
        %v3045 = vextract.low.u32 %v3044
        %v3046 = vextract.high.u32 %v3044
        %v3047 = vmul.u32 %v3040, %v3031
        %v3048 = vadd.s32 %v3043, %v3045
        %vm3049 = vc.u32 %v3043, %v3045
        %v3050 = vadd.s32 %v3046, 1
        %v3051 = vsel %vm3049, %v3050, %v3046
        %v3052 = vadd.s32 %v3047, %v3051
        %v3053 = vadd.s32 %v3052, 536870912
        %v3054 = vshrl.u32 %v3053, 30
        %v3055 = vshll.u32 %v3054, 30
        %v3056 = vsub.s32 %v3052, %v3055
        %vm3057 = vcmp.lt.s32.totalorder %v3056, 0
        %v3058 = vsub.s32 0, %v3056
        %v3059 = vsel %vm3057, %v3058, %v3056
        %v3060 = vclz %v3059
        %v3061 = vsub.s32 %v3060, 2
        %vm3062 = vcmp.gt.s32.totalorder 0, %v3061
        %v3063 = vsel %vm3062, 0, %v3061
        %v3064 = vsub.s32 32, %v3063
        %v3065 = vshll.u32 %v3056, %v3063
        %v3066 = vshrl.u32 %v3048, %v3064
        %v3067 = vor.u32 %v3065, %v3066
        %v3068 = vsub.s32 4294967266, %v3063
        %v3069 = vadd.s32 %v3068, 127
        %v3070 = vshll.u32 %v3069, 23
        %v3071 = vor.u32 4788187, %v3070
        %v3072 = vand.u32 2147483647, %v3071
        %v3074 = vcvt.s32.f32 %v3067
        %v3075 = vmul.f32 %v3074, %v3072
        %v3076 = vxor.u32 %v3075, 2147483648
        %v3077 = vsel %vm2994, %v3076, %v3075
        %v3078 = vsub.s32 4, %v3054
        %v3079 = vsel %vm2994, %v3078, %v3054
        %v3080 = vsel %vm2993, %v2262, %v3077
        %v3081 = vsel %vm2993, 0, %v3079
        %v3082 = vcosq.f32.pop %v3080
        %v3083 = vsinq.f32.pop %v3080
        %vm3084 = vweird.f32 %v2262
        %v3085 = vadd.s32 %v3081, 3
        %v3086 = vand.u32 %v3085, 3
        %vm3087 = vcmp.lt.s32.totalorder %v3086, 2
        %vm3088 = vcmp.eq.s32.totalorder %v3086, 0
        %v3089 = vxor.u32 %v3083, 2147483648
        %v3090 = vsel %vm3088, %v3082, %v3089
        %vm3091 = vcmp.eq.s32.totalorder %v3086, 2
        %v3092 = vxor.u32 %v3082, 2147483648
        %v3093 = vsel %vm3091, %v3092, %v3083
        %v3094 = vsel %vm3087, %v3090, %v3093
        %v3095 = vsel %vm3084, nan, %v3094
        %v3096 = vld [vmem:[%s4] sm:$0x7]
        %v3097 = vld [vmem:[%s5] sm:$0x7]
        %3099 = vset.pattern.permute.xlu0 0
        %3100 = vperm.xlu0 %3099, %v3097
        %v3101 = vpop.permute.xlu0 %3100
        %v3104 = vsel %vm1225, %v3096, 0
        %3106 = vmatprep.subr.mxu0 0.0
        %3107 = vmatpush1.msra.mxu0 0.0
        %3108 = vmatprep.subr.mxu0 0.0
        %3109 = vmatpush1.msra.mxu0 0.0
        %3110 = vmatprep.subr.mxu0 0.0
        %3111 = vmatpush1.msra.mxu0 0.0
        %3112 = vmatprep.subr.mxu0 0.0
        %3113 = vmatpush1.msra.mxu0 0.0
        %3114 = vmatprep.subr.mxu0 0.0
        %3115 = vmatpush1.msra.mxu0 0.0
        %3116 = vmatprep.subr.mxu0 0.0
        %3117 = vmatpush1.msra.mxu0 0.0
        %3118 = vmatprep.subr.mxu0 0.0
        %3119 = vmatpush1.msra.mxu0 0.0
        %3120 = vmatprep.subr.mxu0 0.0
        %3121 = vmatpush1.msra.mxu0 0.0
        %3122 = vmatprep.subr.mxu0 0.0
        %3123 = vmatpush1.msra.mxu0 0.0
        %3124 = vmatprep.subr.mxu0 0.0
        %3125 = vmatpush1.msra.mxu0 0.0
        %3126 = vmatprep.subr.mxu0 0.0
        %3127 = vmatpush1.msra.mxu0 0.0
        %3128 = vmatprep.subr.mxu0 0.0
        %3129 = vmatpush1.msra.mxu0 0.0
        %3130 = vmatprep.subr.mxu0 %v3095
        %3131 = vmatpush1.msra.mxu0 %v2991
        %3132 = vmatprep.subr.mxu0 %v2887
        %3133 = vmatpush1.msra.mxu0 %v2783
        %3134 = vmatprep.subr.mxu0 %v2679
        %3135 = vmatpush1.msra.mxu0 %v2575
        %3136 = vmatprep.subr.mxu0 %v2471
        %3137 = vmatpush1.msra.mxu0 %v2367
        %3138 = vmatprep.subr.mxu0 0.0
        %3139 = vmatpush2.msra.mxu0 0.0
        %3140 = vmatprep.subr.mxu0 0.0
        %3141 = vmatpush2.msra.mxu0 0.0
        %3142 = vmatprep.subr.mxu0 0.0
        %3143 = vmatpush2.msra.mxu0 0.0
        %3144 = vmatprep.subr.mxu0 0.0
        %3145 = vmatpush2.msra.mxu0 0.0
        %3146 = vmatprep.subr.mxu0 0.0
        %3147 = vmatpush2.msra.mxu0 0.0
        %3148 = vmatprep.subr.mxu0 0.0
        %3149 = vmatpush2.msra.mxu0 0.0
        %3150 = vmatprep.subr.mxu0 0.0
        %3151 = vmatpush2.msra.mxu0 0.0
        %3152 = vmatprep.subr.mxu0 0.0
        %3153 = vmatpush2.msra.mxu0 0.0
        %3154 = vmatprep.subr.mxu0 0.0
        %3155 = vmatpush2.msra.mxu0 0.0
        %3156 = vmatprep.subr.mxu0 0.0
        %3157 = vmatpush2.msra.mxu0 0.0
        %3158 = vmatprep.subr.mxu0 0.0
        %3159 = vmatpush2.msra.mxu0 0.0
        %3160 = vmatprep.subr.mxu0 0.0
        %3161 = vmatpush2.msra.mxu0 0.0
        %3162 = vmatprep.subr.mxu0 0.0
        %3163 = vmatpush2.msra.mxu0 0.0
        %3164 = vmatprep.subr.mxu0 0.0
        %3165 = vmatpush2.msra.mxu0 0.0
        %3166 = vmatprep.subr.mxu0 0.0
        %3167 = vmatpush2.msra.mxu0 0.0
        %3168 = vmatprep.subr.mxu0 0.0
        %3169 = vmatpush2.msra.mxu0 0.0
        %3170 = vmatprep.mubr.f32.mxu0 0.0
        %3171 = vmatmul.mubr.f32.gmra.mxu0 %v3104
        %v3172 = vpop.f32.mrf.mxu0
        %v3173 = vadd.f32 %v3101, %v3172
        %v3174 = vpop.f32.mrf.mxu0
        %v3175 = vadd.f32 %v3101, %v3174
        %3176 = vdwg.mxu0
        %v3179 = vcombine.low %v3173, %v3175
        %3181 = vst [vmem:[%s260] sm:$0x77] %v3179
        %s3182 = sand.u32 %s160, 1
        %s3183 = scalar_lea.sflag [#allocation4], %s3182
        %s3184 = sand.u32 %s160, 1
        %s3185 = smul.addr %s3184, 8
        %s3186 = scalar_lea.vmem [#allocation5], %s3185
        // Predicated region
        $region49: #{tpu_custom_call.1} parent=43 // pred_check
          %p3187 = pneg %p170
        $region50: #{tpu_custom_call.1} parent=43 // pred_check_branch
          %3189 = sbr.rel (%p3187) target = $region52
        $region51: #{tpu_custom_call.1} parent=43 // pred_region
          %s3190 = smul.u32 2, %s21
          %s3192 = ssub.s32 128, 128
          %3193 = vsyncadd %s3183, %s3192
          %s3194 = smul.addr %s3190, 64
          %s3195 = scalar_lea.hbm %s6, %s3194
          %s3197 = sshll.u32 %s3186, 4
          %s3198 = int_to_ptr.vmem [resolvable:$true] %s3197
          %3200 = dma.vmem_to_hbm [thread:$0]  %s3198, 128, %s3195, %s3183
        $region52: #{tpu_custom_call.1} parent=43 // pred_fallthru
          _
      $region44: #{tpu_custom_call.1} parent=5 // pred_fallthru
        _
      %p3201 = scmp.le.s32.totalorder 2, %s16
      // Predicated region
      $region53: #{tpu_custom_call.1} parent=5 // pred_check
        %p3202 = pneg %p3201
      $region54: #{tpu_custom_call.1} parent=5 // pred_check_branch
        %3204 = sbr.rel (%p3202) target = $region56
      $region55: #{tpu_custom_call.1} parent=5 // pred_region
        %s3205 = ssub.s32 %s16, 2
        // Predicated region
        $region57: #{tpu_custom_call.1} parent=55 // pred_check
          %p3206 = pneg %p176
        $region58: #{tpu_custom_call.1} parent=55 // pred_check_branch
          %3208 = sbr.rel (%p3206) target = $region60
        $region59: #{tpu_custom_call.1} parent=55 // pred_region
          %s3209 = sand.u32 %s161, 1
          %s3210 = scalar_lea.sflag [#allocation4], %s3209
          %s3211 = sand.u32 %s161, 1
          %s3212 = smul.addr %s3211, 8
          %s3213 = scalar_lea.vmem [#allocation5], %s3212
          %3214 = dma.done %s3210, 128
        $region60: #{tpu_custom_call.1} parent=55 // pred_fallthru
          _
      $region56: #{tpu_custom_call.1} parent=5 // pred_fallthru
        _
    $region6: #{tpu_custom_call.1} parent=1 // loop_footer
      %s20 = sadd.s32 1, %s16
    $region7: #{tpu_custom_call.1} parent=1 // loop_footer_branch
      %15 = sbr.rel target = $region3
    $region8: #{tpu_custom_call.1} parent=1 // loop_exit
      _
    %3215 = vsyncpa [#allocation3], 1
    %s3216 = scalar_lea.sflag [#allocation3], 1
    %3217 = vsyncpa %s3216, 1
    %3218 = vsyncpa [#allocation4], 1
    %s3219 = scalar_lea.sflag [#allocation4], 1
    %3220 = vsyncpa %s3219, 1

</llo_original>
